<compile_context>
chip_gen: v5e
topology: v5e:2x2
jax: 0.10.0
libtpu: 0.0.40
codegen_flags: <defaults>
</compile_context>

<pallas_src>
import functools

import jax
import jax.numpy as jnp
from jax.experimental import pallas as pl
from jax.experimental.pallas import tpu as pltpu

# ----------------------------- configuration -------------------------------
BATCH = 512     # m (demo size; wrapper pads any m to a multiple of TM)
DIM = 32        # feature dimension (even; coupling splits it in half)
HIDDEN = 64     # hidden width of each coupling MLP
N_FLOWS = 4     # number of stacked flows
DHALF = DIM // 2
TM = 256        # batch tile (lane axis inside the kernel), multiple of 128


# ------------------------------ Pallas kernel ------------------------------
def nf_forward_kernel(x_ref, w1_ref, b1_ref, w2_ref, b2_ref,
                      z_ref, stats_ref, *, use_bf16_act):
    """One batch tile, transposed layout (features on sublanes, batch on lanes).

    x_ref   : (DIM, TM)                 f32   input tile (transposed)
    w1_ref  : (N_FLOWS, HIDDEN, DHALF)  bf16
    b1_ref  : (N_FLOWS, HIDDEN, 1)      f32
    w2_ref  : (N_FLOWS, DIM, HIDDEN)    bf16  rows [:DHALF]=log-scale, [DHALF:]=translate
    b2_ref  : (N_FLOWS, DIM, 1)         f32
    z_ref   : (DIM, TM)                 f32   latent z (transposed)
    stats_ref: (2, TM)                  f32   row 0 = prior logprob, row 1 = log_det
    """
    f32, bf16 = jnp.float32, jnp.bfloat16

    # Two coupling halves kept separate the whole way: sublane split at a
    # multiple of 8, no lane shuffles anywhere in the loop.
    xa = x_ref[:DHALF, :].astype(f32)      # (DHALF, TM)
    xb = x_ref[DHALF:, :].astype(f32)      # (DHALF, TM)
    tm = xa.shape[1]
    log_det = jnp.zeros((1, tm), f32)

    for k in range(N_FLOWS):               # static unroll over 4 flows
        cond, trans = (xa, xb) if k % 2 == 0 else (xb, xa)

        # hidden = tanh(W1 @ cond + b1)     -> (HIDDEN, TM), lane-dense
        h_pre = jnp.dot(w1_ref[k], cond.astype(bf16),
                        preferred_element_type=f32) + b1_ref[k]
        if use_bf16_act:                    # v6e/v7x: bf16 EUP transcendentals
            h = jnp.tanh(h_pre.astype(bf16))            # stays bf16 for the MXU
        else:                               # v5e/older: f32 EUP, bf16 only for MXU
            h = jnp.tanh(h_pre).astype(bf16)

        # One fused MXU dot for both heads; split on the SUBLANE axis at a
        # vreg-aligned offset (DHALF = 16, multiple of 8) -> free slices.
        st = jnp.dot(w2_ref[k], h, preferred_element_type=f32) + b2_ref[k]
        s_pre = st[:DHALF, :]               # log-scale head   (DHALF, TM)
        t = st[DHALF:, :]                   # translation head (DHALF, TM)

        if use_bf16_act:
            s = jnp.tanh(s_pre.astype(bf16))             # bounded log-scale
            es = jnp.exp(s).astype(f32)
            s_f32 = s.astype(f32)
        else:
            s_f32 = jnp.tanh(s_pre)
            es = jnp.exp(s_f32)

        new_trans = trans * es + t
        if k % 2 == 0:
            xb = new_trans
        else:
            xa = new_trans

        log_det = log_det + jnp.sum(s_f32, axis=0, keepdims=True)   # (1, TM)

    # Write latent z once (two sublane-aligned stores).
    z_ref[:DHALF, :] = xa
    z_ref[DHALF:, :] = xb

    # Standard-normal prior: sum_d [-0.5*z^2 - 0.5*log(2*pi)].
    lp = (-0.5 * (jnp.sum(xa * xa, axis=0, keepdims=True)
                  + jnp.sum(xb * xb, axis=0, keepdims=True))
          - 0.5 * DIM * jnp.log(2.0 * jnp.pi))
    # Pack both per-row scalars into a single lane-dense (2, TM) output.
    stats_ref[...] = jnp.concatenate([lp, log_det], axis=0)


# ------------------------------ wrapper -------------------------------------
def _resident_spec(shape):
    zeros = (0,) * len(shape)
    return pl.BlockSpec(shape, lambda i, _z=zeros: _z)   # same block for all i


@functools.partial(jax.jit, static_argnames=("tm", "use_bf16_act"))
def nf_forward(x, w1, b1, w2, b2, *, tm=TM, use_bf16_act=True):
    m, d = x.shape
    assert d == DIM and d % 2 == 0
    assert tm % 128 == 0, "batch tile must be lane-dense (multiple of 128)"

    # Pad batch to a multiple of the tile (layout plumbing, sliced off below).
    mp = ((m + tm - 1) // tm) * tm
    x_pad = x if mp == m else jnp.pad(x, ((0, mp - m), (0, 0)))
    xT = x_pad.T                                            # (DIM, mp)

    # Weight layout for the transposed kernel; MXU operands pre-cast to bf16.
    bf16, f32 = jnp.bfloat16, jnp.float32
    w1_t = jnp.swapaxes(w1, 1, 2).astype(bf16)              # (F, HIDDEN, DHALF)
    b1_c = b1[..., None].astype(f32)                        # (F, HIDDEN, 1)
    w2_t = jnp.swapaxes(w2, 1, 2).astype(bf16)              # (F, DIM, HIDDEN)
    b2_c = b2[..., None].astype(f32)                        # (F, DIM, 1)

    kernel = functools.partial(nf_forward_kernel, use_bf16_act=use_bf16_act)

    zT, stats = pl.pallas_call(
        kernel,
        out_shape=(
            jax.ShapeDtypeStruct((d, mp), f32),
            jax.ShapeDtypeStruct((2, mp), f32),
        ),
        grid=(mp // tm,),
        in_specs=[
            pl.BlockSpec((d, tm), lambda i: (0, i)),        # x tile
            _resident_spec((N_FLOWS, HIDDEN, DHALF)),       # weights stay resident
            _resident_spec((N_FLOWS, HIDDEN, 1)),
            _resident_spec((N_FLOWS, DIM, HIDDEN)),
            _resident_spec((N_FLOWS, DIM, 1)),
        ],
        out_specs=[
            pl.BlockSpec((d, tm), lambda i: (0, i)),
            pl.BlockSpec((2, tm), lambda i: (0, i)),
        ],
        compiler_params=pltpu.CompilerParams(
            dimension_semantics=("parallel",)),
    )(xT, w1_t, b1_c, w2_t, b2_c)

    z = zT.T[:m]
    prior_logprob = stats[0, :m]
    log_det = stats[1, :m]
    return z, prior_logprob, log_det


# -------------------------- pure-JAX reference ------------------------------
def nf_forward_ref(x, w1, b1, w2, b2, use_bf16_act):
    """Mirrors the kernel numerics (bf16 MXU operands, optional bf16 tanh/exp)."""
    bf16, f32 = jnp.bfloat16, jnp.float32
    log_det = jnp.zeros((x.shape[0],), f32)
    for k in range(N_FLOWS):
        x1, x2 = x[:, :DHALF], x[:, DHALF:]
        cond, trans = (x1, x2) if k % 2 == 0 else (x2, x1)
        h_pre = jnp.dot(cond.astype(bf16), w1[k].astype(bf16),
                        preferred_element_type=f32) + b1[k]
        h = jnp.tanh(h_pre.astype(bf16)) if use_bf16_act \
            else jnp.tanh(h_pre).astype(bf16)
        st = jnp.dot(h, w2[k].astype(bf16), preferred_element_type=f32) + b2[k]
        s_pre, t = st[:, :DHALF], st[:, DHALF:]
        if use_bf16_act:
            s = jnp.tanh(s_pre.astype(bf16))
            es = jnp.exp(s).astype(f32)
            s_f32 = s.astype(f32)
        else:
            s_f32 = jnp.tanh(s_pre)
            es = jnp.exp(s_f32)
        new_trans = trans * es + t
        x = (jnp.concatenate([cond, new_trans], -1) if k % 2 == 0
             else jnp.concatenate([new_trans, cond], -1))
        log_det = log_det + jnp.sum(s_f32, axis=-1)
    lp = -0.5 * jnp.sum(x * x, -1) - 0.5 * DIM * jnp.log(2.0 * jnp.pi)
    return x, lp, log_det


# --------------------------------- main --------------------------------------
if __name__ == "__main__":
    key = jax.random.PRNGKey(0)
    kx, k1, k2, k3, k4 = jax.random.split(key, 5)

    x = jax.random.normal(kx, (BATCH, DIM), jnp.float32)
    w1 = 0.1 * jax.random.normal(k1, (N_FLOWS, DHALF, HIDDEN), jnp.float32)
    b1 = 0.1 * jax.random.normal(k2, (N_FLOWS, HIDDEN), jnp.float32)
    w2 = 0.1 * jax.random.normal(k3, (N_FLOWS, HIDDEN, DIM), jnp.float32)
    b2 = 0.1 * jax.random.normal(k4, (N_FLOWS, DIM), jnp.float32)

    # bf16 transcendentals only where the EUP supports bf16 (v6e / v7x).
    kind = jax.devices()[0].device_kind.lower()
    use_bf16_act = not any(s in kind for s in ("v2", "v3", "v4", "v5"))

    z, prior_logprob, log_det = nf_forward(
        x, w1, b1, w2, b2, tm=TM, use_bf16_act=use_bf16_act)
    jax.block_until_ready((z, prior_logprob, log_det))

    z_r, lp_r, ld_r = nf_forward_ref(x, w1, b1, w2, b2, use_bf16_act)
    # bf16 tanh/exp may differ by a ulp or two between Mosaic and XLA; use a
    # looser tolerance on that path (numerics otherwise mirror the reference).
    tol = dict(atol=2e-1, rtol=5e-2) if use_bf16_act else dict(atol=2e-3, rtol=2e-3)
    assert jnp.allclose(z, z_r, **tol)
    assert jnp.allclose(prior_logprob, lp_r, **tol)
    assert jnp.allclose(log_det, ld_r, **tol)

    # TODO(synk): inverse() / sample() paths of NormalizingFlowModel are not
    # implemented (forward pass only, as specified).
    print("KERNEL_OK")
</pallas_src>

<mosaic_0001>
module attributes {stable_mosaic.version = 11 : i64} {
  func.func @nf_forward_kernel(%arg0: i32, %arg1: memref<32x256xf32, #tpu.memory_space<vmem>>, %arg2: memref<4x64x16xbf16, #tpu.memory_space<vmem>>, %arg3: memref<4x64x1xf32, #tpu.memory_space<vmem>>, %arg4: memref<4x32x64xbf16, #tpu.memory_space<vmem>>, %arg5: memref<4x32x1xf32, #tpu.memory_space<vmem>>, %arg6: memref<32x256xf32, #tpu.memory_space<vmem>>, %arg7: memref<2x256xf32, #tpu.memory_space<vmem>>) attributes {dimension_semantics = [#tpu.dimension_semantics<parallel>], iteration_bounds = array<i64: 2>, scalar_prefetch = 0 : i64, scratch_operands = 0 : i64, tpu.core_type = #tpu.core_type<tc>, window_params = [{transform_indices = @transform_0, window_bounds = array<i64: 32, 256>}, {pipeline_mode = #tpu.pipeline_mode<synchronous>, transform_indices = @transform_1, window_bounds = array<i64: 4, 64, 16>}, {pipeline_mode = #tpu.pipeline_mode<synchronous>, transform_indices = @transform_2, window_bounds = array<i64: 4, 64, 1>}, {pipeline_mode = #tpu.pipeline_mode<synchronous>, transform_indices = @transform_3, window_bounds = array<i64: 4, 32, 64>}, {pipeline_mode = #tpu.pipeline_mode<synchronous>, transform_indices = @transform_4, window_bounds = array<i64: 4, 32, 1>}, {transform_indices = @transform_5, window_bounds = array<i64: 32, 256>}, {transform_indices = @transform_6, window_bounds = array<i64: 2, 256>}]} {
    %c0 = arith.constant 0 : index
    %c0_0 = arith.constant 0 : index
    %0 = vector.load %arg1[%c0, %c0_0] : memref<32x256xf32, #tpu.memory_space<vmem>>, vector<16x256xf32>
    %c16 = arith.constant 16 : index
    %c0_1 = arith.constant 0 : index
    %1 = vector.load %arg1[%c16, %c0_1] : memref<32x256xf32, #tpu.memory_space<vmem>>, vector<16x256xf32>
    %cst = arith.constant 0.000000e+00 : f32
    %2 = vector.broadcast %cst : f32 to vector<1x256xf32>
    %c0_2 = arith.constant 0 : index
    %c0_3 = arith.constant 0 : index
    %c0_4 = arith.constant 0 : index
    %3 = vector.load %arg2[%c0_2, %c0_3, %c0_4] : memref<4x64x16xbf16, #tpu.memory_space<vmem>>, vector<1x64x16xbf16>
    %4 = vector.shape_cast %3 : vector<1x64x16xbf16> to vector<64x16xbf16>
    %5 = arith.truncf %0 : vector<16x256xf32> to vector<16x256xbf16>
    %cst_5 = arith.constant dense<0.000000e+00> : vector<64x256xf32>
    %6 = tpu.matmul %4, %5, %cst_5 {dimension_numbers = #tpu.dot_dimension_numbers<[1], [0], [0], [1], [0, 0, 1, 1], [], []>} : vector<64x16xbf16>, vector<16x256xbf16>, vector<64x256xf32> -> vector<64x256xf32>
    %c0_6 = arith.constant 0 : index
    %c0_7 = arith.constant 0 : index
    %c0_8 = arith.constant 0 : index
    %7 = vector.load %arg3[%c0_6, %c0_7, %c0_8] : memref<4x64x1xf32, #tpu.memory_space<vmem>>, vector<1x64x1xf32>
    %8 = vector.shape_cast %7 : vector<1x64x1xf32> to vector<64x1xf32>
    %9 = vector.broadcast %8 : vector<64x1xf32> to vector<64x256xf32>
    %10 = arith.addf %6, %9 : vector<64x256xf32>
    %11 = arith.truncf %10 : vector<64x256xf32> to vector<64x256xbf16>
    %12 = math.tanh %11 : vector<64x256xbf16>
    %c0_9 = arith.constant 0 : index
    %c0_10 = arith.constant 0 : index
    %c0_11 = arith.constant 0 : index
    %13 = vector.load %arg4[%c0_9, %c0_10, %c0_11] : memref<4x32x64xbf16, #tpu.memory_space<vmem>>, vector<1x32x64xbf16>
    %14 = vector.shape_cast %13 : vector<1x32x64xbf16> to vector<32x64xbf16>
    %cst_12 = arith.constant dense<0.000000e+00> : vector<32x256xf32>
    %15 = tpu.matmul %14, %12, %cst_12 {dimension_numbers = #tpu.dot_dimension_numbers<[1], [0], [0], [1], [0, 0, 1, 1], [], []>} : vector<32x64xbf16>, vector<64x256xbf16>, vector<32x256xf32> -> vector<32x256xf32>
    %c0_13 = arith.constant 0 : index
    %c0_14 = arith.constant 0 : index
    %c0_15 = arith.constant 0 : index
    %16 = vector.load %arg5[%c0_13, %c0_14, %c0_15] : memref<4x32x1xf32, #tpu.memory_space<vmem>>, vector<1x32x1xf32>
    %17 = vector.shape_cast %16 : vector<1x32x1xf32> to vector<32x1xf32>
    %18 = vector.broadcast %17 : vector<32x1xf32> to vector<32x256xf32>
    %19 = arith.addf %15, %18 : vector<32x256xf32>
    %20 = vector.extract_strided_slice %19 {offsets = [0, 0], sizes = [16, 256], strides = [1, 1]} : vector<32x256xf32> to vector<16x256xf32>
    %21 = vector.extract_strided_slice %19 {offsets = [16, 0], sizes = [16, 256], strides = [1, 1]} : vector<32x256xf32> to vector<16x256xf32>
    %22 = arith.truncf %20 : vector<16x256xf32> to vector<16x256xbf16>
    %23 = math.tanh %22 : vector<16x256xbf16>
    %24 = math.exp %23 : vector<16x256xbf16>
    %25 = arith.extf %24 : vector<16x256xbf16> to vector<16x256xf32>
    %26 = arith.extf %23 : vector<16x256xbf16> to vector<16x256xf32>
    %27 = arith.mulf %1, %25 : vector<16x256xf32>
    %28 = arith.addf %27, %21 : vector<16x256xf32>
    %cst_16 = arith.constant dense<0.000000e+00> : vector<256xf32>
    %29 = vector.multi_reduction <add>, %26, %cst_16 [0] : vector<16x256xf32> to vector<256xf32>
    %30 = vector.shape_cast %29 : vector<256xf32> to vector<1x256xf32>
    %31 = arith.addf %2, %30 : vector<1x256xf32>
    %c1 = arith.constant 1 : index
    %c0_17 = arith.constant 0 : index
    %c0_18 = arith.constant 0 : index
    %32 = vector.load %arg2[%c1, %c0_17, %c0_18] : memref<4x64x16xbf16, #tpu.memory_space<vmem>>, vector<1x64x16xbf16>
    %33 = vector.shape_cast %32 : vector<1x64x16xbf16> to vector<64x16xbf16>
    %34 = arith.truncf %28 : vector<16x256xf32> to vector<16x256xbf16>
    %cst_19 = arith.constant dense<0.000000e+00> : vector<64x256xf32>
    %35 = tpu.matmul %33, %34, %cst_19 {dimension_numbers = #tpu.dot_dimension_numbers<[1], [0], [0], [1], [0, 0, 1, 1], [], []>} : vector<64x16xbf16>, vector<16x256xbf16>, vector<64x256xf32> -> vector<64x256xf32>
    %c1_20 = arith.constant 1 : index
    %c0_21 = arith.constant 0 : index
    %c0_22 = arith.constant 0 : index
    %36 = vector.load %arg3[%c1_20, %c0_21, %c0_22] : memref<4x64x1xf32, #tpu.memory_space<vmem>>, vector<1x64x1xf32>
    %37 = vector.shape_cast %36 : vector<1x64x1xf32> to vector<64x1xf32>
    %38 = vector.broadcast %37 : vector<64x1xf32> to vector<64x256xf32>
    %39 = arith.addf %35, %38 : vector<64x256xf32>
    %40 = arith.truncf %39 : vector<64x256xf32> to vector<64x256xbf16>
    %41 = math.tanh %40 : vector<64x256xbf16>
    %c1_23 = arith.constant 1 : index
    %c0_24 = arith.constant 0 : index
    %c0_25 = arith.constant 0 : index
    %42 = vector.load %arg4[%c1_23, %c0_24, %c0_25] : memref<4x32x64xbf16, #tpu.memory_space<vmem>>, vector<1x32x64xbf16>
    %43 = vector.shape_cast %42 : vector<1x32x64xbf16> to vector<32x64xbf16>
    %cst_26 = arith.constant dense<0.000000e+00> : vector<32x256xf32>
    %44 = tpu.matmul %43, %41, %cst_26 {dimension_numbers = #tpu.dot_dimension_numbers<[1], [0], [0], [1], [0, 0, 1, 1], [], []>} : vector<32x64xbf16>, vector<64x256xbf16>, vector<32x256xf32> -> vector<32x256xf32>
    %c1_27 = arith.constant 1 : index
    %c0_28 = arith.constant 0 : index
    %c0_29 = arith.constant 0 : index
    %45 = vector.load %arg5[%c1_27, %c0_28, %c0_29] : memref<4x32x1xf32, #tpu.memory_space<vmem>>, vector<1x32x1xf32>
    %46 = vector.shape_cast %45 : vector<1x32x1xf32> to vector<32x1xf32>
    %47 = vector.broadcast %46 : vector<32x1xf32> to vector<32x256xf32>
    %48 = arith.addf %44, %47 : vector<32x256xf32>
    %49 = vector.extract_strided_slice %48 {offsets = [0, 0], sizes = [16, 256], strides = [1, 1]} : vector<32x256xf32> to vector<16x256xf32>
    %50 = vector.extract_strided_slice %48 {offsets = [16, 0], sizes = [16, 256], strides = [1, 1]} : vector<32x256xf32> to vector<16x256xf32>
    %51 = arith.truncf %49 : vector<16x256xf32> to vector<16x256xbf16>
    %52 = math.tanh %51 : vector<16x256xbf16>
    %53 = math.exp %52 : vector<16x256xbf16>
    %54 = arith.extf %53 : vector<16x256xbf16> to vector<16x256xf32>
    %55 = arith.extf %52 : vector<16x256xbf16> to vector<16x256xf32>
    %56 = arith.mulf %0, %54 : vector<16x256xf32>
    %57 = arith.addf %56, %50 : vector<16x256xf32>
    %cst_30 = arith.constant dense<0.000000e+00> : vector<256xf32>
    %58 = vector.multi_reduction <add>, %55, %cst_30 [0] : vector<16x256xf32> to vector<256xf32>
    %59 = vector.shape_cast %58 : vector<256xf32> to vector<1x256xf32>
    %60 = arith.addf %31, %59 : vector<1x256xf32>
    %c2 = arith.constant 2 : index
    %c0_31 = arith.constant 0 : index
    %c0_32 = arith.constant 0 : index
    %61 = vector.load %arg2[%c2, %c0_31, %c0_32] : memref<4x64x16xbf16, #tpu.memory_space<vmem>>, vector<1x64x16xbf16>
    %62 = vector.shape_cast %61 : vector<1x64x16xbf16> to vector<64x16xbf16>
    %63 = arith.truncf %57 : vector<16x256xf32> to vector<16x256xbf16>
    %cst_33 = arith.constant dense<0.000000e+00> : vector<64x256xf32>
    %64 = tpu.matmul %62, %63, %cst_33 {dimension_numbers = #tpu.dot_dimension_numbers<[1], [0], [0], [1], [0, 0, 1, 1], [], []>} : vector<64x16xbf16>, vector<16x256xbf16>, vector<64x256xf32> -> vector<64x256xf32>
    %c2_34 = arith.constant 2 : index
    %c0_35 = arith.constant 0 : index
    %c0_36 = arith.constant 0 : index
    %65 = vector.load %arg3[%c2_34, %c0_35, %c0_36] : memref<4x64x1xf32, #tpu.memory_space<vmem>>, vector<1x64x1xf32>
    %66 = vector.shape_cast %65 : vector<1x64x1xf32> to vector<64x1xf32>
    %67 = vector.broadcast %66 : vector<64x1xf32> to vector<64x256xf32>
    %68 = arith.addf %64, %67 : vector<64x256xf32>
    %69 = arith.truncf %68 : vector<64x256xf32> to vector<64x256xbf16>
    %70 = math.tanh %69 : vector<64x256xbf16>
    %c2_37 = arith.constant 2 : index
    %c0_38 = arith.constant 0 : index
    %c0_39 = arith.constant 0 : index
    %71 = vector.load %arg4[%c2_37, %c0_38, %c0_39] : memref<4x32x64xbf16, #tpu.memory_space<vmem>>, vector<1x32x64xbf16>
    %72 = vector.shape_cast %71 : vector<1x32x64xbf16> to vector<32x64xbf16>
    %cst_40 = arith.constant dense<0.000000e+00> : vector<32x256xf32>
    %73 = tpu.matmul %72, %70, %cst_40 {dimension_numbers = #tpu.dot_dimension_numbers<[1], [0], [0], [1], [0, 0, 1, 1], [], []>} : vector<32x64xbf16>, vector<64x256xbf16>, vector<32x256xf32> -> vector<32x256xf32>
    %c2_41 = arith.constant 2 : index
    %c0_42 = arith.constant 0 : index
    %c0_43 = arith.constant 0 : index
    %74 = vector.load %arg5[%c2_41, %c0_42, %c0_43] : memref<4x32x1xf32, #tpu.memory_space<vmem>>, vector<1x32x1xf32>
    %75 = vector.shape_cast %74 : vector<1x32x1xf32> to vector<32x1xf32>
    %76 = vector.broadcast %75 : vector<32x1xf32> to vector<32x256xf32>
    %77 = arith.addf %73, %76 : vector<32x256xf32>
    %78 = vector.extract_strided_slice %77 {offsets = [0, 0], sizes = [16, 256], strides = [1, 1]} : vector<32x256xf32> to vector<16x256xf32>
    %79 = vector.extract_strided_slice %77 {offsets = [16, 0], sizes = [16, 256], strides = [1, 1]} : vector<32x256xf32> to vector<16x256xf32>
    %80 = arith.truncf %78 : vector<16x256xf32> to vector<16x256xbf16>
    %81 = math.tanh %80 : vector<16x256xbf16>
    %82 = math.exp %81 : vector<16x256xbf16>
    %83 = arith.extf %82 : vector<16x256xbf16> to vector<16x256xf32>
    %84 = arith.extf %81 : vector<16x256xbf16> to vector<16x256xf32>
    %85 = arith.mulf %28, %83 : vector<16x256xf32>
    %86 = arith.addf %85, %79 : vector<16x256xf32>
    %cst_44 = arith.constant dense<0.000000e+00> : vector<256xf32>
    %87 = vector.multi_reduction <add>, %84, %cst_44 [0] : vector<16x256xf32> to vector<256xf32>
    %88 = vector.shape_cast %87 : vector<256xf32> to vector<1x256xf32>
    %89 = arith.addf %60, %88 : vector<1x256xf32>
    %c3 = arith.constant 3 : index
    %c0_45 = arith.constant 0 : index
    %c0_46 = arith.constant 0 : index
    %90 = vector.load %arg2[%c3, %c0_45, %c0_46] : memref<4x64x16xbf16, #tpu.memory_space<vmem>>, vector<1x64x16xbf16>
    %91 = vector.shape_cast %90 : vector<1x64x16xbf16> to vector<64x16xbf16>
    %92 = arith.truncf %86 : vector<16x256xf32> to vector<16x256xbf16>
    %cst_47 = arith.constant dense<0.000000e+00> : vector<64x256xf32>
    %93 = tpu.matmul %91, %92, %cst_47 {dimension_numbers = #tpu.dot_dimension_numbers<[1], [0], [0], [1], [0, 0, 1, 1], [], []>} : vector<64x16xbf16>, vector<16x256xbf16>, vector<64x256xf32> -> vector<64x256xf32>
    %c3_48 = arith.constant 3 : index
    %c0_49 = arith.constant 0 : index
    %c0_50 = arith.constant 0 : index
    %94 = vector.load %arg3[%c3_48, %c0_49, %c0_50] : memref<4x64x1xf32, #tpu.memory_space<vmem>>, vector<1x64x1xf32>
    %95 = vector.shape_cast %94 : vector<1x64x1xf32> to vector<64x1xf32>
    %96 = vector.broadcast %95 : vector<64x1xf32> to vector<64x256xf32>
    %97 = arith.addf %93, %96 : vector<64x256xf32>
    %98 = arith.truncf %97 : vector<64x256xf32> to vector<64x256xbf16>
    %99 = math.tanh %98 : vector<64x256xbf16>
    %c3_51 = arith.constant 3 : index
    %c0_52 = arith.constant 0 : index
    %c0_53 = arith.constant 0 : index
    %100 = vector.load %arg4[%c3_51, %c0_52, %c0_53] : memref<4x32x64xbf16, #tpu.memory_space<vmem>>, vector<1x32x64xbf16>
    %101 = vector.shape_cast %100 : vector<1x32x64xbf16> to vector<32x64xbf16>
    %cst_54 = arith.constant dense<0.000000e+00> : vector<32x256xf32>
    %102 = tpu.matmul %101, %99, %cst_54 {dimension_numbers = #tpu.dot_dimension_numbers<[1], [0], [0], [1], [0, 0, 1, 1], [], []>} : vector<32x64xbf16>, vector<64x256xbf16>, vector<32x256xf32> -> vector<32x256xf32>
    %c3_55 = arith.constant 3 : index
    %c0_56 = arith.constant 0 : index
    %c0_57 = arith.constant 0 : index
    %103 = vector.load %arg5[%c3_55, %c0_56, %c0_57] : memref<4x32x1xf32, #tpu.memory_space<vmem>>, vector<1x32x1xf32>
    %104 = vector.shape_cast %103 : vector<1x32x1xf32> to vector<32x1xf32>
    %105 = vector.broadcast %104 : vector<32x1xf32> to vector<32x256xf32>
    %106 = arith.addf %102, %105 : vector<32x256xf32>
    %107 = vector.extract_strided_slice %106 {offsets = [0, 0], sizes = [16, 256], strides = [1, 1]} : vector<32x256xf32> to vector<16x256xf32>
    %108 = vector.extract_strided_slice %106 {offsets = [16, 0], sizes = [16, 256], strides = [1, 1]} : vector<32x256xf32> to vector<16x256xf32>
    %109 = arith.truncf %107 : vector<16x256xf32> to vector<16x256xbf16>
    %110 = math.tanh %109 : vector<16x256xbf16>
    %111 = math.exp %110 : vector<16x256xbf16>
    %112 = arith.extf %111 : vector<16x256xbf16> to vector<16x256xf32>
    %113 = arith.extf %110 : vector<16x256xbf16> to vector<16x256xf32>
    %114 = arith.mulf %57, %112 : vector<16x256xf32>
    %115 = arith.addf %114, %108 : vector<16x256xf32>
    %cst_58 = arith.constant dense<0.000000e+00> : vector<256xf32>
    %116 = vector.multi_reduction <add>, %113, %cst_58 [0] : vector<16x256xf32> to vector<256xf32>
    %117 = vector.shape_cast %116 : vector<256xf32> to vector<1x256xf32>
    %118 = arith.addf %89, %117 : vector<1x256xf32>
    %c0_59 = arith.constant 0 : index
    %c0_60 = arith.constant 0 : index
    %119 = vector.load %arg6[%c0_59, %c0_60] : memref<32x256xf32, #tpu.memory_space<vmem>>, vector<16x256xf32>
    tpu.vector_store %arg6[%c0_59, %c0_60], %115 {strides = array<i32>} : memref<32x256xf32, #tpu.memory_space<vmem>>, vector<16x256xf32>,
    %c16_61 = arith.constant 16 : index
    %c0_62 = arith.constant 0 : index
    %120 = vector.load %arg6[%c16_61, %c0_62] : memref<32x256xf32, #tpu.memory_space<vmem>>, vector<16x256xf32>
    tpu.vector_store %arg6[%c16_61, %c0_62], %86 {strides = array<i32>} : memref<32x256xf32, #tpu.memory_space<vmem>>, vector<16x256xf32>,
    %121 = arith.mulf %115, %115 : vector<16x256xf32>
    %cst_63 = arith.constant dense<0.000000e+00> : vector<256xf32>
    %122 = vector.multi_reduction <add>, %121, %cst_63 [0] : vector<16x256xf32> to vector<256xf32>
    %123 = vector.shape_cast %122 : vector<256xf32> to vector<1x256xf32>
    %124 = arith.mulf %86, %86 : vector<16x256xf32>
    %cst_64 = arith.constant dense<0.000000e+00> : vector<256xf32>
    %125 = vector.multi_reduction <add>, %124, %cst_64 [0] : vector<16x256xf32> to vector<256xf32>
    %126 = vector.shape_cast %125 : vector<256xf32> to vector<1x256xf32>
    %127 = arith.addf %123, %126 : vector<1x256xf32>
    %cst_65 = arith.constant -5.000000e-01 : f32
    %128 = vector.broadcast %cst_65 : f32 to vector<1x256xf32>
    %129 = arith.mulf %128, %127 : vector<1x256xf32>
    %cst_66 = arith.constant 6.28318548 : f32
    %130 = math.log %cst_66 : f32
    %cst_67 = arith.constant 1.600000e+01 : f32
    %131 = arith.mulf %cst_67, %130 : f32
    %132 = vector.broadcast %131 : f32 to vector<1x256xf32>
    %133 = arith.subf %129, %132 : vector<1x256xf32>
    %134 = tpu.concatenate %133, %118 in 0 : vector<1x256xf32>, vector<1x256xf32> -> vector<2x256xf32>
    %c0_68 = arith.constant 0 : index
    %c0_69 = arith.constant 0 : index
    %135 = vector.load %arg7[%c0_68, %c0_69] : memref<2x256xf32, #tpu.memory_space<vmem>>, vector<2x256xf32>
    tpu.vector_store %arg7[%c0_68, %c0_69], %134 {strides = array<i32>} : memref<2x256xf32, #tpu.memory_space<vmem>>, vector<2x256xf32>,
    return
  }
  func.func @transform_0(%arg0: i32) -> (i32, i32) {
    %c0_i32 = arith.constant 0 : i32
    %c0_i32_0 = arith.constant 0 : i32
    return %c0_i32, %arg0 : i32, i32
  }
  func.func @transform_1(%arg0: i32) -> (i32, i32, i32) {
    %c0_i32 = arith.constant 0 : i32
    %c0_i32_0 = arith.constant 0 : i32
    %c0_i32_1 = arith.constant 0 : i32
    %c0_i32_2 = arith.constant 0 : i32
    return %c0_i32, %c0_i32_0, %c0_i32_1 : i32, i32, i32
  }
  func.func @transform_2(%arg0: i32) -> (i32, i32, i32) {
    %c0_i32 = arith.constant 0 : i32
    %c0_i32_0 = arith.constant 0 : i32
    %c0_i32_1 = arith.constant 0 : i32
    %c0_i32_2 = arith.constant 0 : i32
    return %c0_i32, %c0_i32_0, %c0_i32_1 : i32, i32, i32
  }
  func.func @transform_3(%arg0: i32) -> (i32, i32, i32) {
    %c0_i32 = arith.constant 0 : i32
    %c0_i32_0 = arith.constant 0 : i32
    %c0_i32_1 = arith.constant 0 : i32
    %c0_i32_2 = arith.constant 0 : i32
    return %c0_i32, %c0_i32_0, %c0_i32_1 : i32, i32, i32
  }
  func.func @transform_4(%arg0: i32) -> (i32, i32, i32) {
    %c0_i32 = arith.constant 0 : i32
    %c0_i32_0 = arith.constant 0 : i32
    %c0_i32_1 = arith.constant 0 : i32
    %c0_i32_2 = arith.constant 0 : i32
    return %c0_i32, %c0_i32_0, %c0_i32_1 : i32, i32, i32
  }
  func.func @transform_5(%arg0: i32) -> (i32, i32) {
    %c0_i32 = arith.constant 0 : i32
    %c0_i32_0 = arith.constant 0 : i32
    return %c0_i32, %arg0 : i32, i32
  }
  func.func @transform_6(%arg0: i32) -> (i32, i32) {
    %c0_i32 = arith.constant 0 : i32
    %c0_i32_0 = arith.constant 0 : i32
    return %c0_i32, %arg0 : i32, i32
  }
}

</mosaic_0001>

<llo_original>
// kernel: nf_forward.1
$region0: #{nf_forward.1}
  #allocation0 [shape = 'u32[]', space=smem, size = 0x4, offset = 0x4, fixed_abs, tag = 'smem constant byte address 0x4 - core index']
  #allocation1 [shape = 'u32[72,128]{1,0:T(1,128)}', space=vmem, size = 0x9000, scoped, tag = 'internal scratch']
  %s0 = inlined_call_operand.vmem [shape: f32[32,512], index: 0, kind: input, shape index: {}]
  %s1 = inlined_call_operand.vmem [shape: bf16[4,64,16], index: 1, kind: input, shape index: {}]
  %s2 = inlined_call_operand.vmem [shape: f32[4,64,1], index: 2, kind: input, shape index: {}]
  %s3 = inlined_call_operand.vmem [shape: bf16[4,32,64], index: 3, kind: input, shape index: {}]
  %s4 = inlined_call_operand.vmem [shape: f32[4,32,1], index: 4, kind: input, shape index: {}]
  %s5 = inlined_call_operand.hbm [shape: f32[32,512], index: 5, kind: output, shape index: {0}]
  %s6 = inlined_call_operand.vmem [shape: f32[2,512], index: 6, kind: output, shape index: {1}]
  %7 = xla_tuple %s5, %s6
  %s8 = sld [smem:[#allocation0]]
  $region84: #{nf_forward.1} parent=0
    _
  %s10 = ssub.s32 1, %s8
  %s11 = scalar_select 0, %s10, %s8
  $region1: #{nf_forward.1} parent=0
    #allocation2 [shape = 'u8[65536]{0}', space=vmem, size = 0x10000, scoped, tag = 'input window, operand 0']
    #allocation3 [shape = 'u8[65536]{0}', space=vmem, size = 0x10000, scoped, tag = 'output window, operand 0']
    #allocation4 [shape = 's32[2]{0}', space=sflag, size = 0x8, scoped, tag = 'scoped memory for nf_forward.1']
    %12 = vsyncpa [#allocation4], 0
    %s13 = scalar_lea.sflag [#allocation4], 1
    %14 = vsyncpa %s13, 0
    loop: start=0, step=1, limit=4
    $region2: #{nf_forward.1} parent=1 // loop_pre_header
      _
    $region3: #{nf_forward.1} parent=1 // loop_header
      %s16 = sphi 0, %s20
      %p17 = scmp.ge.s32.totalorder %s16, 4
      %s26 = sphi 0, %s28
      %s29 = sphi 0, %s26
      %s30 = sphi 0, %s29
      %s46 = sphi 0, %s30
      %s50 = sphi 0, %s50
      %s52 = sphi 0, %s50
      %s53 = sphi 0, %s52
      %s67 = sphi 0, %s53
      %s71 = sphi 0, %s71
      %s73 = sphi 0, %s71
      %s74 = sphi 0, %s73
      %s88 = sphi 0, %s74
      %s92 = sphi 0, %s92
      %s94 = sphi 0, %s92
      %s95 = sphi 0, %s94
      %s109 = sphi 0, %s95
      %s113 = sphi 0, %s113
      %s115 = sphi 0, %s113
      %s116 = sphi 0, %s115
      %s130 = sphi 0, %s116
      %s136 = sphi 0, %s138
      %s139 = sphi 0, %s136
      %s140 = sphi 0, %s139
      %s156 = sphi 0, %s140
      %s162 = sphi 0, %s164
      %s165 = sphi 0, %s162
      %s166 = sphi 0, %s165
      %s182 = sphi 0, %s166
    $region4: #{nf_forward.1} parent=1 // loop_header_branch
      %19 = sbr.rel (%p17) target = $region8
    $region5: #{nf_forward.1} parent=1 // loop_body
      %s21 = ssub.s32 %s16, 1
      %s22 = ssub.s32 %s16, 2
      %s23 = sadd.s32 %s16, 1
      %s24 = ssub.s32 %s16, %s23
      %p25 = scmp.eq.s32.totalorder %s24, 0
      %s27 = sadd.s32 %s26, 1
      %s28 = scalar_select %p25, %s26, %s27
      %p31 = pneg %p25
      %p32 = scmp.eq.s32.totalorder %s16, 1
      %p33 = por %p31, %p32
      %p34 = scmp.ne.s32.totalorder %s26, %s29
      %p35 = scmp.eq.s32.totalorder %s16, 0
      %p36 = por %p34, %p35
      %p37 = scmp.ne.s32.totalorder %s26, %s29
      %p38 = scmp.eq.s32.totalorder %s21, 1
      %p39 = por %p37, %p38
      %p40 = scmp.ne.s32.totalorder %s29, %s30
      %p41 = scmp.eq.s32.totalorder %s21, 0
      %p42 = por %p40, %p41
      %p43 = scmp.ne.s32.totalorder %s29, %s30
      %p44 = scmp.eq.s32.totalorder %s22, 1
      %p45 = por %p43, %p44
      %p47 = scmp.ne.s32.totalorder %s30, %s46
      %p48 = scmp.eq.s32.totalorder %s22, 0
      %p49 = por %p47, %p48
      %s51 = sadd.s32 %s50, 1
      %p54 = scmp.eq.s32.totalorder %s16, 1
      %p55 = scmp.ne.s32.totalorder %s50, %s52
      %p56 = scmp.eq.s32.totalorder %s16, 0
      %p57 = por %p55, %p56
      %p58 = scmp.ne.s32.totalorder %s50, %s52
      %p59 = scmp.eq.s32.totalorder %s21, 1
      %p60 = por %p58, %p59
      %p61 = scmp.ne.s32.totalorder %s52, %s53
      %p62 = scmp.eq.s32.totalorder %s21, 0
      %p63 = por %p61, %p62
      %p64 = scmp.ne.s32.totalorder %s52, %s53
      %p65 = scmp.eq.s32.totalorder %s22, 1
      %p66 = por %p64, %p65
      %p68 = scmp.ne.s32.totalorder %s53, %s67
      %p69 = scmp.eq.s32.totalorder %s22, 0
      %p70 = por %p68, %p69
      %s72 = sadd.s32 %s71, 1
      %p75 = scmp.eq.s32.totalorder %s16, 1
      %p76 = scmp.ne.s32.totalorder %s71, %s73
      %p77 = scmp.eq.s32.totalorder %s16, 0
      %p78 = por %p76, %p77
      %p79 = scmp.ne.s32.totalorder %s71, %s73
      %p80 = scmp.eq.s32.totalorder %s21, 1
      %p81 = por %p79, %p80
      %p82 = scmp.ne.s32.totalorder %s73, %s74
      %p83 = scmp.eq.s32.totalorder %s21, 0
      %p84 = por %p82, %p83
      %p85 = scmp.ne.s32.totalorder %s73, %s74
      %p86 = scmp.eq.s32.totalorder %s22, 1
      %p87 = por %p85, %p86
      %p89 = scmp.ne.s32.totalorder %s74, %s88
      %p90 = scmp.eq.s32.totalorder %s22, 0
      %p91 = por %p89, %p90
      %s93 = sadd.s32 %s92, 1
      %p96 = scmp.eq.s32.totalorder %s16, 1
      %p97 = scmp.ne.s32.totalorder %s92, %s94
      %p98 = scmp.eq.s32.totalorder %s16, 0
      %p99 = por %p97, %p98
      %p100 = scmp.ne.s32.totalorder %s92, %s94
      %p101 = scmp.eq.s32.totalorder %s21, 1
      %p102 = por %p100, %p101
      %p103 = scmp.ne.s32.totalorder %s94, %s95
      %p104 = scmp.eq.s32.totalorder %s21, 0
      %p105 = por %p103, %p104
      %p106 = scmp.ne.s32.totalorder %s94, %s95
      %p107 = scmp.eq.s32.totalorder %s22, 1
      %p108 = por %p106, %p107
      %p110 = scmp.ne.s32.totalorder %s95, %s109
      %p111 = scmp.eq.s32.totalorder %s22, 0
      %p112 = por %p110, %p111
      %s114 = sadd.s32 %s113, 1
      %p117 = scmp.eq.s32.totalorder %s16, 1
      %p118 = scmp.ne.s32.totalorder %s113, %s115
      %p119 = scmp.eq.s32.totalorder %s16, 0
      %p120 = por %p118, %p119
      %p121 = scmp.ne.s32.totalorder %s113, %s115
      %p122 = scmp.eq.s32.totalorder %s21, 1
      %p123 = por %p121, %p122
      %p124 = scmp.ne.s32.totalorder %s115, %s116
      %p125 = scmp.eq.s32.totalorder %s21, 0
      %p126 = por %p124, %p125
      %p127 = scmp.ne.s32.totalorder %s115, %s116
      %p128 = scmp.eq.s32.totalorder %s22, 1
      %p129 = por %p127, %p128
      %p131 = scmp.ne.s32.totalorder %s116, %s130
      %p132 = scmp.eq.s32.totalorder %s22, 0
      %p133 = por %p131, %p132
      %s134 = ssub.s32 %s16, %s23
      %p135 = scmp.eq.s32.totalorder %s134, 0
      %s137 = sadd.s32 %s136, 1
      %s138 = scalar_select %p135, %s136, %s137
      %p141 = pneg %p135
      %p142 = scmp.eq.s32.totalorder %s16, 1
      %p143 = por %p141, %p142
      %p144 = scmp.ne.s32.totalorder %s136, %s139
      %p145 = scmp.eq.s32.totalorder %s16, 0
      %p146 = por %p144, %p145
      %p147 = scmp.ne.s32.totalorder %s136, %s139
      %p148 = scmp.eq.s32.totalorder %s21, 1
      %p149 = por %p147, %p148
      %p150 = scmp.ne.s32.totalorder %s139, %s140
      %p151 = scmp.eq.s32.totalorder %s21, 0
      %p152 = por %p150, %p151
      %p153 = scmp.ne.s32.totalorder %s139, %s140
      %p154 = scmp.eq.s32.totalorder %s22, 1
      %p155 = por %p153, %p154
      %p157 = scmp.ne.s32.totalorder %s140, %s156
      %p158 = scmp.eq.s32.totalorder %s22, 0
      %p159 = por %p157, %p158
      %s160 = ssub.s32 %s16, %s23
      %p161 = scmp.eq.s32.totalorder %s160, 0
      %s163 = sadd.s32 %s162, 1
      %s164 = scalar_select %p161, %s162, %s163
      %p167 = pneg %p161
      %p168 = scmp.eq.s32.totalorder %s16, 1
      %p169 = por %p167, %p168
      %p170 = scmp.ne.s32.totalorder %s162, %s165
      %p171 = scmp.eq.s32.totalorder %s16, 0
      %p172 = por %p170, %p171
      %p173 = scmp.ne.s32.totalorder %s162, %s165
      %p174 = scmp.eq.s32.totalorder %s21, 1
      %p175 = por %p173, %p174
      %p176 = scmp.ne.s32.totalorder %s165, %s166
      %p177 = scmp.eq.s32.totalorder %s21, 0
      %p178 = por %p176, %p177
      %p179 = scmp.ne.s32.totalorder %s165, %s166
      %p180 = scmp.eq.s32.totalorder %s22, 1
      %p181 = por %p179, %p180
      %p183 = scmp.ne.s32.totalorder %s166, %s182
      %p184 = scmp.eq.s32.totalorder %s22, 0
      %p185 = por %p183, %p184
      %p186 = scmp.le.s32.totalorder 1, %s16
      %p187 = scmp.lt.s32.totalorder %s16, 3
      %p188 = pnand %p186, %p187
      %p189 = pneg %p188
      // Predicated region
      $region9: #{nf_forward.1} parent=5 // pred_check
        _
      $region10: #{nf_forward.1} parent=5 // pred_check_branch
        %191 = sbr.rel (%p188) target = $region12
      $region11: #{nf_forward.1} parent=5 // pred_region
        %s192 = ssub.s32 %s16, 1
        // Predicated region
        $region13: #{nf_forward.1} parent=11 // pred_check
          %p193 = pneg %p63
        $region14: #{nf_forward.1} parent=11 // pred_check_branch
          %195 = sbr.rel (%p193) target = $region16
        $region15: #{nf_forward.1} parent=11 // pred_region
          _
        $region16: #{nf_forward.1} parent=11 // pred_fallthru
          _
        // Predicated region
        $region17: #{nf_forward.1} parent=11 // pred_check
          %p196 = pneg %p84
        $region18: #{nf_forward.1} parent=11 // pred_check_branch
          %198 = sbr.rel (%p196) target = $region20
        $region19: #{nf_forward.1} parent=11 // pred_region
          _
        $region20: #{nf_forward.1} parent=11 // pred_fallthru
          _
        // Predicated region
        $region21: #{nf_forward.1} parent=11 // pred_check
          %p199 = pneg %p105
        $region22: #{nf_forward.1} parent=11 // pred_check_branch
          %201 = sbr.rel (%p199) target = $region24
        $region23: #{nf_forward.1} parent=11 // pred_region
          _
        $region24: #{nf_forward.1} parent=11 // pred_fallthru
          _
        // Predicated region
        $region25: #{nf_forward.1} parent=11 // pred_check
          %p202 = pneg %p126
        $region26: #{nf_forward.1} parent=11 // pred_check_branch
          %204 = sbr.rel (%p202) target = $region28
        $region27: #{nf_forward.1} parent=11 // pred_region
          _
        $region28: #{nf_forward.1} parent=11 // pred_fallthru
          _
      $region12: #{nf_forward.1} parent=5 // pred_fallthru
        _
      %p205 = scmp.lt.s32.totalorder %s16, 2
      // Predicated region
      $region29: #{nf_forward.1} parent=5 // pred_check
        %p206 = pneg %p205
      $region30: #{nf_forward.1} parent=5 // pred_check_branch
        %208 = sbr.rel (%p206) target = $region32
      $region31: #{nf_forward.1} parent=5 // pred_region
        // Predicated region
        $region33: #{nf_forward.1} parent=31 // pred_check
          %p209 = pneg %p36
        $region34: #{nf_forward.1} parent=31 // pred_check_branch
          %211 = sbr.rel (%p209) target = $region36
        $region35: #{nf_forward.1} parent=31 // pred_region
          %s212 = sand.u32 %s26, 1
          %s213 = sand.u32 %s26, 1
          %s214 = smul.addr %s213, 64
          %s215 = scalar_lea.vmem [#allocation2], %s214
          %s216 = smul.u32 2, %s16
          %s217 = smul.addr %s216, 8
          %s218 = scalar_lea.vmem %s0, %s217
          // Predicated region
          $region37: #{nf_forward.1} parent=35 // pred_check
            _
          $region38: #{nf_forward.1} parent=35 // pred_check_branch
            %220 = sbr.rel (0) target = $region40
          $region39: #{nf_forward.1} parent=35 // pred_region
            // Predicated region
            $region41: #{nf_forward.1} parent=39 // pred_check
              _
            $region42: #{nf_forward.1} parent=39 // pred_check_branch
              %222 = sbr.rel (0) target = $region44
            $region43: #{nf_forward.1} parent=39 // pred_region
              loop: start=0, step=1, limit=1
              $region45: #{nf_forward.1} parent=43 // loop_pre_header
                _
              $region46: #{nf_forward.1} parent=43 // loop_header
                %s224 = sphi 0, %s228
                %p225 = scmp.ge.s32.totalorder %s224, 1
                %s229 = sphi %s218, %s218
                %s230 = sphi %s215, %s215
              $region47: #{nf_forward.1} parent=43 // loop_header_branch
                %227 = sbr.rel (%p225) target = $region51
              $region48: #{nf_forward.1} parent=43 // loop_body
                %v231 = vld [vmem:[%s229] sm:$0xff]
                %232 = vst [vmem:[%s230] sm:$0xff] %v231
                %v233 = vld [vmem:[%s229 + $0x8] sm:$0xff]
                %234 = vst [vmem:[%s230 + $0x8] sm:$0xff] %v233
                %v235 = vld [vmem:[%s229 + $0x20] sm:$0xff]
                %236 = vst [vmem:[%s230 + $0x10] sm:$0xff] %v235
                %v237 = vld [vmem:[%s229 + $0x28] sm:$0xff]
                %238 = vst [vmem:[%s230 + $0x18] sm:$0xff] %v237
                %v239 = vld [vmem:[%s229 + $0x40] sm:$0xff]
                %240 = vst [vmem:[%s230 + $0x20] sm:$0xff] %v239
                %v241 = vld [vmem:[%s229 + $0x48] sm:$0xff]
                %242 = vst [vmem:[%s230 + $0x28] sm:$0xff] %v241
                %v243 = vld [vmem:[%s229 + $0x60] sm:$0xff]
                %244 = vst [vmem:[%s230 + $0x30] sm:$0xff] %v243
                %v245 = vld [vmem:[%s229 + $0x68] sm:$0xff]
                %246 = vst [vmem:[%s230 + $0x38] sm:$0xff] %v245
              $region49: #{nf_forward.1} parent=43 // loop_footer
                %s228 = sadd.s32 1, %s224
              $region50: #{nf_forward.1} parent=43 // loop_footer_branch
                %223 = sbr.rel target = $region46
              $region51: #{nf_forward.1} parent=43 // loop_exit
                _
            $region44: #{nf_forward.1} parent=39 // pred_fallthru
              _
            // Predicated region
            $region52: #{nf_forward.1} parent=39 // pred_check
              _
            $region53: #{nf_forward.1} parent=39 // pred_check_branch
              %248 = sbr.rel target = $region55
            $region54: #{nf_forward.1} parent=39 // pred_region
              _
            $region55: #{nf_forward.1} parent=39 // pred_fallthru
              _
          $region40: #{nf_forward.1} parent=35 // pred_fallthru
            _
          %249 = vnop
        $region36: #{nf_forward.1} parent=31 // pred_fallthru
          _
      $region32: #{nf_forward.1} parent=5 // pred_fallthru
        _
      %p250 = scmp.le.s32.totalorder 1, %s16
      %p251 = scmp.lt.s32.totalorder %s16, 3
      %p252 = pnand %p250, %p251
      %p253 = pneg %p252
      // Predicated region
      $region56: #{nf_forward.1} parent=5 // pred_check
        _
      $region57: #{nf_forward.1} parent=5 // pred_check_branch
        %255 = sbr.rel (%p252) target = $region59
      $region58: #{nf_forward.1} parent=5 // pred_region
        %s256 = ssub.s32 %s16, 1
        %s257 = sand.u32 %s29, 1
        %s258 = sand.u32 %s29, 1
        %s259 = smul.addr %s258, 64
        %s260 = scalar_lea.vmem [#allocation2], %s259
        // Predicated region
        $region60: #{nf_forward.1} parent=58 // pred_check
          %p261 = pneg %p42
        $region61: #{nf_forward.1} parent=58 // pred_check_branch
          %263 = sbr.rel (%p261) target = $region63
        $region62: #{nf_forward.1} parent=58 // pred_region
          _
        $region63: #{nf_forward.1} parent=58 // pred_fallthru
          _
        %s264 = sand.u32 %s29, 1
        %s265 = sand.u32 %s29, 1
        %s266 = smul.addr %s265, 64
        %s267 = scalar_lea.vmem [#allocation2], %s266
        %p268 = pneg %p42
        %p269 = pneg %p39
        %p270 = pneg %p63
        %p271 = pneg %p60
        %p272 = pneg %p84
        %p273 = pneg %p81
        %p274 = pneg %p105
        %p275 = pneg %p102
        %p276 = pneg %p126
        %p277 = pneg %p123
        %p278 = pneg %p152
        %p279 = pneg %p149
        %s280 = sand.u32 %s139, 1
        %s281 = scalar_lea.sflag [#allocation4], %s280
        %s282 = sand.u32 %s139, 1
        %s283 = smul.addr %s282, 64
        %s284 = scalar_lea.vmem [#allocation3], %s283
        %p285 = pneg %p178
        %p286 = pneg %p175
        %s287 = smul.u32 2, %s21
        %p288 = scmp.lt.s32.totalorder %s287, 3
        %s289 = scalar_select %p288, %s287, 3
        %s290 = smul.addr %s289, 2
        %s291 = scalar_lea.vmem %s6, %s290
        %s292 = smul.u32 2, %s21
        %s293 = smul.u32 2, %s21
        %s294 = smul.u32 2, %s21
        %p295 = scmp.lt.s32.totalorder %s294, 3
        %s296 = scalar_select %p295, %s294, 3
        %s297 = smul.addr %s296, 2
        %s298 = scalar_lea.vmem %s6, %s297
        %s299 = smul.u32 2, %s21
        %v301 = vld [vmem:[%s260] sm:$0xff]
        %v302 = vld [vmem:[%s260 + $0x8] sm:$0xff]
        %v303 = vld [vmem:[%s260 + $0x10] sm:$0xff]
        %v304 = vld [vmem:[%s260 + $0x18] sm:$0xff]
        %v305 = vld [vmem:[%s260 + $0x20] sm:$0xff]
        %v306 = vld [vmem:[%s260 + $0x28] sm:$0xff]
        %v307 = vld [vmem:[%s260 + $0x30] sm:$0xff]
        %v308 = vld [vmem:[%s260 + $0x38] sm:$0xff]
        %v309 = vld [vmem:[%s1] sm:$0xf]
        %v310 = vld [vmem:[%s1 + $0x4] sm:$0xf]
        %v311 = vld [vmem:[%s1 + $0x8] sm:$0xf]
        %v312 = vld [vmem:[%s1 + $0xc] sm:$0xf]
        %v313 = vld [vmem:[%s1 + $0x10] sm:$0xf]
        %v314 = vld [vmem:[%s1 + $0x14] sm:$0xf]
        %v315 = vld [vmem:[%s1 + $0x18] sm:$0xf]
        %v316 = vld [vmem:[%s1 + $0x1c] sm:$0xf]
        %v317 = vpack.c.bf16 %v303, %v301
        %v318 = vpack.c.bf16 %v304, %v302
        %v319 = vld [vmem:[%s2] sm:$0xff]
        %v320 = vld [vmem:[%s2 + $0x8] sm:$0xff]
        %v321 = vld [vmem:[%s2 + $0x10] sm:$0xff]
        %v322 = vld [vmem:[%s2 + $0x18] sm:$0xff]
        %v323 = vld [vmem:[%s2 + $0x20] sm:$0xff]
        %v324 = vld [vmem:[%s2 + $0x28] sm:$0xff]
        %v325 = vld [vmem:[%s2 + $0x30] sm:$0xff]
        %v326 = vld [vmem:[%s2 + $0x38] sm:$0xff]
        %328 = vset.pattern.permute.xlu0 0
        %329 = vperm.xlu0 %328, %v319
        %v330 = vpop.permute.xlu0 %329
        %333 = vset.pattern.permute.xlu0 0
        %334 = vperm.xlu0 %333, %v320
        %v335 = vpop.permute.xlu0 %334
        %338 = vset.pattern.permute.xlu0 0
        %339 = vperm.xlu0 %338, %v321
        %v340 = vpop.permute.xlu0 %339
        %343 = vset.pattern.permute.xlu0 0
        %344 = vperm.xlu0 %343, %v322
        %v345 = vpop.permute.xlu0 %344
        %348 = vset.pattern.permute.xlu0 0
        %349 = vperm.xlu0 %348, %v323
        %v350 = vpop.permute.xlu0 %349
        %353 = vset.pattern.permute.xlu0 0
        %354 = vperm.xlu0 %353, %v324
        %v355 = vpop.permute.xlu0 %354
        %358 = vset.pattern.permute.xlu0 0
        %359 = vperm.xlu0 %358, %v325
        %v360 = vpop.permute.xlu0 %359
        %363 = vset.pattern.permute.xlu0 0
        %364 = vperm.xlu0 %363, %v326
        %v365 = vpop.permute.xlu0 %364
        %v375 = vunpack.c.l.b16 %v309
        %v376 = vunpack.c.l.b16 %v310
        %v377 = vunpack.c.l.b16 %v311
        %v378 = vunpack.c.l.b16 %v312
        %v379 = vunpack.c.l.b16 %v313
        %v380 = vunpack.c.l.b16 %v314
        %v381 = vunpack.c.l.b16 %v315
        %v382 = vunpack.c.l.b16 %v316
        %v383 = vpack.c.b16 %v376, %v375
        %v384 = vpack.c.b16 %v378, %v377
        %v385 = vpack.c.b16 %v380, %v379
        %v386 = vpack.c.b16 %v382, %v381
        %vm387 = vcmask 130048
        %v389 = vsel %vm387, %v383, 0
        %v392 = vsel %vm387, %v384, 0
        %v395 = vsel %vm387, %v385, 0
        %v398 = vsel %vm387, %v386, 0
        %400 = vmatpush.bf16.msra.mxu0 0
        %401 = vmatpush.bf16.msra.mxu0 0
        %402 = vmatpush.bf16.msra.mxu0 0
        %403 = vmatpush.bf16.msra.mxu0 0
        %404 = vmatpush.bf16.msra.mxu0 0
        %405 = vmatpush.bf16.msra.mxu0 0
        %406 = vmatpush.bf16.msra.mxu0 0
        %407 = vmatpush.bf16.msra.mxu0 %v317
        %408 = vmatmul.bf16.gmra.mxu0 %v389
        %v409 = vpop.f32.mrf.mxu0
        %v410 = vadd.f32 %v330, %v409
        %v411 = vpop.f32.mrf.mxu0
        %v412 = vadd.f32 %v335, %v411
        %413 = vmatmul.bf16.gmra.mxu0 %v392
        %v414 = vpop.f32.mrf.mxu0
        %v415 = vadd.f32 %v340, %v414
        %v416 = vpop.f32.mrf.mxu0
        %v417 = vadd.f32 %v345, %v416
        %418 = vmatmul.bf16.gmra.mxu0 %v395
        %v419 = vpop.f32.mrf.mxu0
        %v420 = vadd.f32 %v350, %v419
        %v421 = vpop.f32.mrf.mxu0
        %v422 = vadd.f32 %v355, %v421
        %423 = vmatmul.bf16.gmra.mxu0 %v398
        %v424 = vpop.f32.mrf.mxu0
        %v425 = vadd.f32 %v360, %v424
        %v426 = vpop.f32.mrf.mxu0
        %v427 = vadd.f32 %v365, %v426
        %428 = vdwg.mxu0
        %429 = vmatpush.bf16.msra.mxu0 0
        %430 = vmatpush.bf16.msra.mxu0 0
        %431 = vmatpush.bf16.msra.mxu0 0
        %432 = vmatpush.bf16.msra.mxu0 0
        %433 = vmatpush.bf16.msra.mxu0 0
        %434 = vmatpush.bf16.msra.mxu0 0
        %435 = vmatpush.bf16.msra.mxu0 0
        %436 = vmatpush.bf16.msra.mxu0 %v318
        %437 = vmatmul.bf16.gmra.mxu0 %v389
        %v438 = vpop.f32.mrf.mxu0
        %v439 = vadd.f32 %v330, %v438
        %v440 = vpop.f32.mrf.mxu0
        %v441 = vadd.f32 %v335, %v440
        %442 = vmatmul.bf16.gmra.mxu0 %v392
        %v443 = vpop.f32.mrf.mxu0
        %v444 = vadd.f32 %v340, %v443
        %v445 = vpop.f32.mrf.mxu0
        %v446 = vadd.f32 %v345, %v445
        %447 = vmatmul.bf16.gmra.mxu0 %v395
        %v448 = vpop.f32.mrf.mxu0
        %v449 = vadd.f32 %v350, %v448
        %v450 = vpop.f32.mrf.mxu0
        %v451 = vadd.f32 %v355, %v450
        %452 = vmatmul.bf16.gmra.mxu0 %v398
        %v453 = vpop.f32.mrf.mxu0
        %v454 = vadd.f32 %v360, %v453
        %v455 = vpop.f32.mrf.mxu0
        %v456 = vadd.f32 %v365, %v455
        %457 = vdwg.mxu0
        %v458 = vpack.c.bf16 %v412, %v410
        %v459 = vpack.c.bf16 %v441, %v439
        %v460 = vpack.c.bf16 %v417, %v415
        %v461 = vpack.c.bf16 %v446, %v444
        %v462 = vpack.c.bf16 %v422, %v420
        %v463 = vpack.c.bf16 %v451, %v449
        %v464 = vpack.c.bf16 %v427, %v425
        %v465 = vpack.c.bf16 %v456, %v454
        %v466 = vunpack.c.l.bf16 %v458
        %v467 = vunpack.c.l.bf16 %v459
        %v468 = vunpack.c.h.bf16 %v458
        %v469 = vunpack.c.h.bf16 %v459
        %v470 = vunpack.c.l.bf16 %v460
        %v471 = vunpack.c.l.bf16 %v461
        %v472 = vunpack.c.h.bf16 %v460
        %v473 = vunpack.c.h.bf16 %v461
        %v474 = vunpack.c.l.bf16 %v462
        %v475 = vunpack.c.l.bf16 %v463
        %v476 = vunpack.c.h.bf16 %v462
        %v477 = vunpack.c.h.bf16 %v463
        %v478 = vunpack.c.l.bf16 %v464
        %v479 = vunpack.c.l.bf16 %v465
        %v480 = vunpack.c.h.bf16 %v464
        %v481 = vunpack.c.h.bf16 %v465
        %v482 = vtanh.pop %v466
        %v483 = vtanh.pop %v467
        %v484 = vtanh.pop %v468
        %v485 = vtanh.pop %v469
        %v486 = vtanh.pop %v470
        %v487 = vtanh.pop %v471
        %v488 = vtanh.pop %v472
        %v489 = vtanh.pop %v473
        %v490 = vtanh.pop %v474
        %v491 = vtanh.pop %v475
        %v492 = vtanh.pop %v476
        %v493 = vtanh.pop %v477
        %v494 = vtanh.pop %v478
        %v495 = vtanh.pop %v479
        %v496 = vtanh.pop %v480
        %v497 = vtanh.pop %v481
        %v498 = vpack.c.bf16 %v484, %v482
        %v499 = vpack.c.bf16 %v485, %v483
        %v500 = vpack.c.bf16 %v488, %v486
        %v501 = vpack.c.bf16 %v489, %v487
        %v502 = vpack.c.bf16 %v492, %v490
        %v503 = vpack.c.bf16 %v493, %v491
        %v504 = vpack.c.bf16 %v496, %v494
        %v505 = vpack.c.bf16 %v497, %v495
        %v506 = vld [vmem:[%s3] sm:$0xf]
        %v507 = vld [vmem:[%s3 + $0x4] sm:$0xf]
        %v508 = vld [vmem:[%s3 + $0x8] sm:$0xf]
        %v509 = vld [vmem:[%s3 + $0xc] sm:$0xf]
        %v510 = vld [vmem:[%s4] sm:$0xff]
        %v511 = vld [vmem:[%s4 + $0x8] sm:$0xff]
        %v512 = vld [vmem:[%s4 + $0x10] sm:$0xff]
        %v513 = vld [vmem:[%s4 + $0x18] sm:$0xff]
        %515 = vset.pattern.permute.xlu0 0
        %516 = vperm.xlu0 %515, %v510
        %v517 = vpop.permute.xlu0 %516
        %520 = vset.pattern.permute.xlu0 0
        %521 = vperm.xlu0 %520, %v511
        %v522 = vpop.permute.xlu0 %521
        %525 = vset.pattern.permute.xlu0 0
        %526 = vperm.xlu0 %525, %v512
        %v527 = vpop.permute.xlu0 %526
        %530 = vset.pattern.permute.xlu0 0
        %531 = vperm.xlu0 %530, %v513
        %v532 = vpop.permute.xlu0 %531
        %v538 = vunpack.c.l.b16 %v506
        %v539 = vunpack.c.l.b16 %v507
        %v540 = vunpack.c.l.b16 %v508
        %v541 = vunpack.c.l.b16 %v509
        %v542 = vpack.c.b16 %v539, %v538
        %v543 = vpack.c.b16 %v541, %v540
        %vm544 = vcmask 523264
        %v546 = vsel %vm544, %v542, 0
        %v549 = vsel %vm544, %v543, 0
        %551 = vmatpush.bf16.msra.mxu0 0
        %552 = vmatpush.bf16.msra.mxu0 0
        %553 = vmatpush.bf16.msra.mxu0 0
        %554 = vmatpush.bf16.msra.mxu0 0
        %555 = vmatpush.bf16.msra.mxu0 %v504
        %556 = vmatpush.bf16.msra.mxu0 %v502
        %557 = vmatpush.bf16.msra.mxu0 %v500
        %558 = vmatpush.bf16.msra.mxu0 %v498
        %559 = vmatmul.bf16.gmra.mxu0 %v546
        %v560 = vpop.f32.mrf.mxu0
        %v561 = vadd.f32 %v517, %v560
        %v562 = vpop.f32.mrf.mxu0
        %v563 = vadd.f32 %v522, %v562
        %564 = vmatmul.bf16.gmra.mxu0 %v549
        %v565 = vpop.f32.mrf.mxu0
        %v566 = vadd.f32 %v527, %v565
        %v567 = vpop.f32.mrf.mxu0
        %v568 = vadd.f32 %v532, %v567
        %569 = vdwg.mxu0
        %570 = vmatpush.bf16.msra.mxu0 0
        %571 = vmatpush.bf16.msra.mxu0 0
        %572 = vmatpush.bf16.msra.mxu0 0
        %573 = vmatpush.bf16.msra.mxu0 0
        %574 = vmatpush.bf16.msra.mxu0 %v505
        %575 = vmatpush.bf16.msra.mxu0 %v503
        %576 = vmatpush.bf16.msra.mxu0 %v501
        %577 = vmatpush.bf16.msra.mxu0 %v499
        %578 = vmatmul.bf16.gmra.mxu0 %v546
        %v579 = vpop.f32.mrf.mxu0
        %v580 = vadd.f32 %v517, %v579
        %v581 = vpop.f32.mrf.mxu0
        %v582 = vadd.f32 %v522, %v581
        %583 = vmatmul.bf16.gmra.mxu0 %v549
        %v584 = vpop.f32.mrf.mxu0
        %v585 = vadd.f32 %v527, %v584
        %v586 = vpop.f32.mrf.mxu0
        %v587 = vadd.f32 %v532, %v586
        %588 = vdwg.mxu0
        %v589 = vpack.c.bf16 %v580, %v561
        %v590 = vpack.c.bf16 %v582, %v563
        %v591 = vunpack.c.l.bf16 %v589
        %v592 = vunpack.c.h.bf16 %v589
        %v593 = vunpack.c.l.bf16 %v590
        %v594 = vunpack.c.h.bf16 %v590
        %v595 = vtanh.pop %v591
        %v596 = vtanh.pop %v592
        %v597 = vtanh.pop %v593
        %v598 = vtanh.pop %v594
        %v599 = vpack.c.bf16 %v596, %v595
        %v600 = vpack.c.bf16 %v598, %v597
        %v601 = vunpack.c.l.bf16 %v599
        %v602 = vunpack.c.h.bf16 %v599
        %v603 = vunpack.c.l.bf16 %v600
        %v604 = vunpack.c.h.bf16 %v600
        %v605 = vmul.f32 %v601, 1.442695
        %v606 = vpow.pop %v605
        %v607 = vmul.f32 %v602, 1.442695
        %v608 = vpow.pop %v607
        %v609 = vmul.f32 %v603, 1.442695
        %v610 = vpow.pop %v609
        %v611 = vmul.f32 %v604, 1.442695
        %v612 = vpow.pop %v611
        %v613 = vpack.c.bf16 %v608, %v606
        %v614 = vpack.c.bf16 %v612, %v610
        %v615 = vunpack.c.l.bf16 %v613
        %v616 = vunpack.c.h.bf16 %v613
        %v617 = vunpack.c.l.bf16 %v614
        %v618 = vunpack.c.h.bf16 %v614
        %v619 = vmul.f32 %v305, %v615
        %v620 = vmul.f32 %v306, %v616
        %v621 = vmul.f32 %v307, %v617
        %v622 = vmul.f32 %v308, %v618
        %v623 = vadd.f32 %v619, %v566
        %v624 = vadd.f32 %v620, %v585
        %v625 = vadd.f32 %v621, %v568
        %v626 = vadd.f32 %v622, %v587
        %v627 = vadd.f32 %v601, %v603
        %v628 = vrot.slane %v627, 4
        %v629 = vadd.f32 %v627, %v628
        %v630 = vrot.slane %v629, 2
        %v631 = vadd.f32 %v629, %v630
        %v632 = vrot.slane %v631, 1
        %v633 = vadd.f32 %v631, %v632
        %v634 = vadd.f32 %v602, %v604
        %v635 = vrot.slane %v634, 4
        %v636 = vadd.f32 %v634, %v635
        %v637 = vrot.slane %v636, 2
        %v638 = vadd.f32 %v636, %v637
        %v639 = vrot.slane %v638, 1
        %v640 = vadd.f32 %v638, %v639
        %v641 = vadd.f32 %v633, 0.0
        %v642 = vadd.f32 %v640, 0.0
        %s643 = scalar_lea.vmem %s1, 32
        %v644 = vld [vmem:[%s643] sm:$0xf]
        %v645 = vld [vmem:[%s643 + $0x4] sm:$0xf]
        %v646 = vld [vmem:[%s643 + $0x8] sm:$0xf]
        %v647 = vld [vmem:[%s643 + $0xc] sm:$0xf]
        %v648 = vld [vmem:[%s643 + $0x10] sm:$0xf]
        %v649 = vld [vmem:[%s643 + $0x14] sm:$0xf]
        %v650 = vld [vmem:[%s643 + $0x18] sm:$0xf]
        %v651 = vld [vmem:[%s643 + $0x1c] sm:$0xf]
        %v652 = vpack.c.bf16 %v625, %v623
        %v653 = vpack.c.bf16 %v626, %v624
        %s654 = scalar_lea.vmem %s2, 64
        %v655 = vld [vmem:[%s654] sm:$0xff]
        %v656 = vld [vmem:[%s654 + $0x8] sm:$0xff]
        %v657 = vld [vmem:[%s654 + $0x10] sm:$0xff]
        %v658 = vld [vmem:[%s654 + $0x18] sm:$0xff]
        %v659 = vld [vmem:[%s654 + $0x20] sm:$0xff]
        %v660 = vld [vmem:[%s654 + $0x28] sm:$0xff]
        %v661 = vld [vmem:[%s654 + $0x30] sm:$0xff]
        %v662 = vld [vmem:[%s654 + $0x38] sm:$0xff]
        %664 = vset.pattern.permute.xlu0 0
        %665 = vperm.xlu0 %664, %v655
        %v666 = vpop.permute.xlu0 %665
        %669 = vset.pattern.permute.xlu0 0
        %670 = vperm.xlu0 %669, %v656
        %v671 = vpop.permute.xlu0 %670
        %674 = vset.pattern.permute.xlu0 0
        %675 = vperm.xlu0 %674, %v657
        %v676 = vpop.permute.xlu0 %675
        %679 = vset.pattern.permute.xlu0 0
        %680 = vperm.xlu0 %679, %v658
        %v681 = vpop.permute.xlu0 %680
        %684 = vset.pattern.permute.xlu0 0
        %685 = vperm.xlu0 %684, %v659
        %v686 = vpop.permute.xlu0 %685
        %689 = vset.pattern.permute.xlu0 0
        %690 = vperm.xlu0 %689, %v660
        %v691 = vpop.permute.xlu0 %690
        %694 = vset.pattern.permute.xlu0 0
        %695 = vperm.xlu0 %694, %v661
        %v696 = vpop.permute.xlu0 %695
        %699 = vset.pattern.permute.xlu0 0
        %700 = vperm.xlu0 %699, %v662
        %v701 = vpop.permute.xlu0 %700
        %v711 = vunpack.c.l.b16 %v644
        %v712 = vunpack.c.l.b16 %v645
        %v713 = vunpack.c.l.b16 %v646
        %v714 = vunpack.c.l.b16 %v647
        %v715 = vunpack.c.l.b16 %v648
        %v716 = vunpack.c.l.b16 %v649
        %v717 = vunpack.c.l.b16 %v650
        %v718 = vunpack.c.l.b16 %v651
        %v719 = vpack.c.b16 %v712, %v711
        %v720 = vpack.c.b16 %v714, %v713
        %v721 = vpack.c.b16 %v716, %v715
        %v722 = vpack.c.b16 %v718, %v717
        %v724 = vsel %vm387, %v719, 0
        %v727 = vsel %vm387, %v720, 0
        %v730 = vsel %vm387, %v721, 0
        %v733 = vsel %vm387, %v722, 0
        %735 = vmatpush.bf16.msra.mxu0 0
        %736 = vmatpush.bf16.msra.mxu0 0
        %737 = vmatpush.bf16.msra.mxu0 0
        %738 = vmatpush.bf16.msra.mxu0 0
        %739 = vmatpush.bf16.msra.mxu0 0
        %740 = vmatpush.bf16.msra.mxu0 0
        %741 = vmatpush.bf16.msra.mxu0 0
        %742 = vmatpush.bf16.msra.mxu0 %v652
        %743 = vmatmul.bf16.gmra.mxu0 %v724
        %v744 = vpop.f32.mrf.mxu0
        %v745 = vadd.f32 %v666, %v744
        %v746 = vpop.f32.mrf.mxu0
        %v747 = vadd.f32 %v671, %v746
        %748 = vmatmul.bf16.gmra.mxu0 %v727
        %v749 = vpop.f32.mrf.mxu0
        %v750 = vadd.f32 %v676, %v749
        %v751 = vpop.f32.mrf.mxu0
        %v752 = vadd.f32 %v681, %v751
        %753 = vmatmul.bf16.gmra.mxu0 %v730
        %v754 = vpop.f32.mrf.mxu0
        %v755 = vadd.f32 %v686, %v754
        %v756 = vpop.f32.mrf.mxu0
        %v757 = vadd.f32 %v691, %v756
        %758 = vmatmul.bf16.gmra.mxu0 %v733
        %v759 = vpop.f32.mrf.mxu0
        %v760 = vadd.f32 %v696, %v759
        %v761 = vpop.f32.mrf.mxu0
        %v762 = vadd.f32 %v701, %v761
        %763 = vdwg.mxu0
        %764 = vmatpush.bf16.msra.mxu0 0
        %765 = vmatpush.bf16.msra.mxu0 0
        %766 = vmatpush.bf16.msra.mxu0 0
        %767 = vmatpush.bf16.msra.mxu0 0
        %768 = vmatpush.bf16.msra.mxu0 0
        %769 = vmatpush.bf16.msra.mxu0 0
        %770 = vmatpush.bf16.msra.mxu0 0
        %771 = vmatpush.bf16.msra.mxu0 %v653
        %772 = vmatmul.bf16.gmra.mxu0 %v724
        %v773 = vpop.f32.mrf.mxu0
        %v774 = vadd.f32 %v666, %v773
        %v775 = vpop.f32.mrf.mxu0
        %v776 = vadd.f32 %v671, %v775
        %777 = vmatmul.bf16.gmra.mxu0 %v727
        %v778 = vpop.f32.mrf.mxu0
        %v779 = vadd.f32 %v676, %v778
        %v780 = vpop.f32.mrf.mxu0
        %v781 = vadd.f32 %v681, %v780
        %782 = vmatmul.bf16.gmra.mxu0 %v730
        %v783 = vpop.f32.mrf.mxu0
        %v784 = vadd.f32 %v686, %v783
        %v785 = vpop.f32.mrf.mxu0
        %v786 = vadd.f32 %v691, %v785
        %787 = vmatmul.bf16.gmra.mxu0 %v733
        %v788 = vpop.f32.mrf.mxu0
        %v789 = vadd.f32 %v696, %v788
        %v790 = vpop.f32.mrf.mxu0
        %v791 = vadd.f32 %v701, %v790
        %792 = vdwg.mxu0
        %v793 = vpack.c.bf16 %v747, %v745
        %v794 = vpack.c.bf16 %v776, %v774
        %v795 = vpack.c.bf16 %v752, %v750
        %v796 = vpack.c.bf16 %v781, %v779
        %v797 = vpack.c.bf16 %v757, %v755
        %v798 = vpack.c.bf16 %v786, %v784
        %v799 = vpack.c.bf16 %v762, %v760
        %v800 = vpack.c.bf16 %v791, %v789
        %v801 = vunpack.c.l.bf16 %v793
        %v802 = vunpack.c.l.bf16 %v794
        %v803 = vunpack.c.h.bf16 %v793
        %v804 = vunpack.c.h.bf16 %v794
        %v805 = vunpack.c.l.bf16 %v795
        %v806 = vunpack.c.l.bf16 %v796
        %v807 = vunpack.c.h.bf16 %v795
        %v808 = vunpack.c.h.bf16 %v796
        %v809 = vunpack.c.l.bf16 %v797
        %v810 = vunpack.c.l.bf16 %v798
        %v811 = vunpack.c.h.bf16 %v797
        %v812 = vunpack.c.h.bf16 %v798
        %v813 = vunpack.c.l.bf16 %v799
        %v814 = vunpack.c.l.bf16 %v800
        %v815 = vunpack.c.h.bf16 %v799
        %v816 = vunpack.c.h.bf16 %v800
        %v817 = vtanh.pop %v801
        %v818 = vtanh.pop %v802
        %v819 = vtanh.pop %v803
        %v820 = vtanh.pop %v804
        %v821 = vtanh.pop %v805
        %v822 = vtanh.pop %v806
        %v823 = vtanh.pop %v807
        %v824 = vtanh.pop %v808
        %v825 = vtanh.pop %v809
        %v826 = vtanh.pop %v810
        %v827 = vtanh.pop %v811
        %v828 = vtanh.pop %v812
        %v829 = vtanh.pop %v813
        %v830 = vtanh.pop %v814
        %v831 = vtanh.pop %v815
        %v832 = vtanh.pop %v816
        %v833 = vpack.c.bf16 %v819, %v817
        %v834 = vpack.c.bf16 %v820, %v818
        %v835 = vpack.c.bf16 %v823, %v821
        %v836 = vpack.c.bf16 %v824, %v822
        %v837 = vpack.c.bf16 %v827, %v825
        %v838 = vpack.c.bf16 %v828, %v826
        %v839 = vpack.c.bf16 %v831, %v829
        %v840 = vpack.c.bf16 %v832, %v830
        %s841 = scalar_lea.vmem %s3, 16
        %v842 = vld [vmem:[%s841] sm:$0xf]
        %v843 = vld [vmem:[%s841 + $0x4] sm:$0xf]
        %v844 = vld [vmem:[%s841 + $0x8] sm:$0xf]
        %v845 = vld [vmem:[%s841 + $0xc] sm:$0xf]
        %s846 = scalar_lea.vmem %s4, 32
        %v847 = vld [vmem:[%s846] sm:$0xff]
        %v848 = vld [vmem:[%s846 + $0x8] sm:$0xff]
        %v849 = vld [vmem:[%s846 + $0x10] sm:$0xff]
        %v850 = vld [vmem:[%s846 + $0x18] sm:$0xff]
        %852 = vset.pattern.permute.xlu0 0
        %853 = vperm.xlu0 %852, %v847
        %v854 = vpop.permute.xlu0 %853
        %857 = vset.pattern.permute.xlu0 0
        %858 = vperm.xlu0 %857, %v848
        %v859 = vpop.permute.xlu0 %858
        %862 = vset.pattern.permute.xlu0 0
        %863 = vperm.xlu0 %862, %v849
        %v864 = vpop.permute.xlu0 %863
        %867 = vset.pattern.permute.xlu0 0
        %868 = vperm.xlu0 %867, %v850
        %v869 = vpop.permute.xlu0 %868
        %v875 = vunpack.c.l.b16 %v842
        %v876 = vunpack.c.l.b16 %v843
        %v877 = vunpack.c.l.b16 %v844
        %v878 = vunpack.c.l.b16 %v845
        %v879 = vpack.c.b16 %v876, %v875
        %v880 = vpack.c.b16 %v878, %v877
        %v882 = vsel %vm544, %v879, 0
        %v885 = vsel %vm544, %v880, 0
        %887 = vmatpush.bf16.msra.mxu0 0
        %888 = vmatpush.bf16.msra.mxu0 0
        %889 = vmatpush.bf16.msra.mxu0 0
        %890 = vmatpush.bf16.msra.mxu0 0
        %891 = vmatpush.bf16.msra.mxu0 %v839
        %892 = vmatpush.bf16.msra.mxu0 %v837
        %893 = vmatpush.bf16.msra.mxu0 %v835
        %894 = vmatpush.bf16.msra.mxu0 %v833
        %895 = vmatmul.bf16.gmra.mxu0 %v882
        %v896 = vpop.f32.mrf.mxu0
        %v897 = vadd.f32 %v854, %v896
        %v898 = vpop.f32.mrf.mxu0
        %v899 = vadd.f32 %v859, %v898
        %900 = vmatmul.bf16.gmra.mxu0 %v885
        %v901 = vpop.f32.mrf.mxu0
        %v902 = vadd.f32 %v864, %v901
        %v903 = vpop.f32.mrf.mxu0
        %v904 = vadd.f32 %v869, %v903
        %905 = vdwg.mxu0
        %906 = vmatpush.bf16.msra.mxu0 0
        %907 = vmatpush.bf16.msra.mxu0 0
        %908 = vmatpush.bf16.msra.mxu0 0
        %909 = vmatpush.bf16.msra.mxu0 0
        %910 = vmatpush.bf16.msra.mxu0 %v840
        %911 = vmatpush.bf16.msra.mxu0 %v838
        %912 = vmatpush.bf16.msra.mxu0 %v836
        %913 = vmatpush.bf16.msra.mxu0 %v834
        %914 = vmatmul.bf16.gmra.mxu0 %v882
        %v915 = vpop.f32.mrf.mxu0
        %v916 = vadd.f32 %v854, %v915
        %v917 = vpop.f32.mrf.mxu0
        %v918 = vadd.f32 %v859, %v917
        %919 = vmatmul.bf16.gmra.mxu0 %v885
        %v920 = vpop.f32.mrf.mxu0
        %v921 = vadd.f32 %v864, %v920
        %v922 = vpop.f32.mrf.mxu0
        %v923 = vadd.f32 %v869, %v922
        %924 = vdwg.mxu0
        %v925 = vpack.c.bf16 %v916, %v897
        %v926 = vpack.c.bf16 %v918, %v899
        %v927 = vunpack.c.l.bf16 %v925
        %v928 = vunpack.c.h.bf16 %v925
        %v929 = vunpack.c.l.bf16 %v926
        %v930 = vunpack.c.h.bf16 %v926
        %v931 = vtanh.pop %v927
        %v932 = vtanh.pop %v928
        %v933 = vtanh.pop %v929
        %v934 = vtanh.pop %v930
        %v935 = vpack.c.bf16 %v932, %v931
        %v936 = vpack.c.bf16 %v934, %v933
        %v937 = vunpack.c.l.bf16 %v935
        %v938 = vunpack.c.h.bf16 %v935
        %v939 = vunpack.c.l.bf16 %v936
        %v940 = vunpack.c.h.bf16 %v936
        %v941 = vmul.f32 %v937, 1.442695
        %v942 = vpow.pop %v941
        %v943 = vmul.f32 %v938, 1.442695
        %v944 = vpow.pop %v943
        %v945 = vmul.f32 %v939, 1.442695
        %v946 = vpow.pop %v945
        %v947 = vmul.f32 %v940, 1.442695
        %v948 = vpow.pop %v947
        %v949 = vpack.c.bf16 %v944, %v942
        %v950 = vpack.c.bf16 %v948, %v946
        %v951 = vunpack.c.l.bf16 %v949
        %v952 = vunpack.c.h.bf16 %v949
        %v953 = vunpack.c.l.bf16 %v950
        %v954 = vunpack.c.h.bf16 %v950
        %v955 = vmul.f32 %v301, %v951
        %v956 = vmul.f32 %v302, %v952
        %v957 = vmul.f32 %v303, %v953
        %v958 = vmul.f32 %v304, %v954
        %v959 = vadd.f32 %v955, %v902
        %v960 = vadd.f32 %v956, %v921
        %v961 = vadd.f32 %v957, %v904
        %v962 = vadd.f32 %v958, %v923
        %v963 = vadd.f32 %v937, %v939
        %v964 = vrot.slane %v963, 4
        %v965 = vadd.f32 %v963, %v964
        %v966 = vrot.slane %v965, 2
        %v967 = vadd.f32 %v965, %v966
        %v968 = vrot.slane %v967, 1
        %v969 = vadd.f32 %v967, %v968
        %v970 = vadd.f32 %v938, %v940
        %v971 = vrot.slane %v970, 4
        %v972 = vadd.f32 %v970, %v971
        %v973 = vrot.slane %v972, 2
        %v974 = vadd.f32 %v972, %v973
        %v975 = vrot.slane %v974, 1
        %v976 = vadd.f32 %v974, %v975
        %v977 = vadd.f32 %v641, %v969
        %v978 = vadd.f32 %v642, %v976
        %s979 = scalar_lea.vmem %s1, 64
        %v980 = vld [vmem:[%s979] sm:$0xf]
        %v981 = vld [vmem:[%s979 + $0x4] sm:$0xf]
        %v982 = vld [vmem:[%s979 + $0x8] sm:$0xf]
        %v983 = vld [vmem:[%s979 + $0xc] sm:$0xf]
        %v984 = vld [vmem:[%s979 + $0x10] sm:$0xf]
        %v985 = vld [vmem:[%s979 + $0x14] sm:$0xf]
        %v986 = vld [vmem:[%s979 + $0x18] sm:$0xf]
        %v987 = vld [vmem:[%s979 + $0x1c] sm:$0xf]
        %v988 = vpack.c.bf16 %v961, %v959
        %v989 = vpack.c.bf16 %v962, %v960
        %s990 = scalar_lea.vmem %s2, 128
        %v991 = vld [vmem:[%s990] sm:$0xff]
        %v992 = vld [vmem:[%s990 + $0x8] sm:$0xff]
        %v993 = vld [vmem:[%s990 + $0x10] sm:$0xff]
        %v994 = vld [vmem:[%s990 + $0x18] sm:$0xff]
        %v995 = vld [vmem:[%s990 + $0x20] sm:$0xff]
        %v996 = vld [vmem:[%s990 + $0x28] sm:$0xff]
        %v997 = vld [vmem:[%s990 + $0x30] sm:$0xff]
        %v998 = vld [vmem:[%s990 + $0x38] sm:$0xff]
        %1000 = vset.pattern.permute.xlu0 0
        %1001 = vperm.xlu0 %1000, %v991
        %v1002 = vpop.permute.xlu0 %1001
        %1005 = vset.pattern.permute.xlu0 0
        %1006 = vperm.xlu0 %1005, %v992
        %v1007 = vpop.permute.xlu0 %1006
        %1010 = vset.pattern.permute.xlu0 0
        %1011 = vperm.xlu0 %1010, %v993
        %v1012 = vpop.permute.xlu0 %1011
        %1015 = vset.pattern.permute.xlu0 0
        %1016 = vperm.xlu0 %1015, %v994
        %v1017 = vpop.permute.xlu0 %1016
        %1020 = vset.pattern.permute.xlu0 0
        %1021 = vperm.xlu0 %1020, %v995
        %v1022 = vpop.permute.xlu0 %1021
        %1025 = vset.pattern.permute.xlu0 0
        %1026 = vperm.xlu0 %1025, %v996
        %v1027 = vpop.permute.xlu0 %1026
        %1030 = vset.pattern.permute.xlu0 0
        %1031 = vperm.xlu0 %1030, %v997
        %v1032 = vpop.permute.xlu0 %1031
        %1035 = vset.pattern.permute.xlu0 0
        %1036 = vperm.xlu0 %1035, %v998
        %v1037 = vpop.permute.xlu0 %1036
        %v1047 = vunpack.c.l.b16 %v980
        %v1048 = vunpack.c.l.b16 %v981
        %v1049 = vunpack.c.l.b16 %v982
        %v1050 = vunpack.c.l.b16 %v983
        %v1051 = vunpack.c.l.b16 %v984
        %v1052 = vunpack.c.l.b16 %v985
        %v1053 = vunpack.c.l.b16 %v986
        %v1054 = vunpack.c.l.b16 %v987
        %v1055 = vpack.c.b16 %v1048, %v1047
        %v1056 = vpack.c.b16 %v1050, %v1049
        %v1057 = vpack.c.b16 %v1052, %v1051
        %v1058 = vpack.c.b16 %v1054, %v1053
        %v1060 = vsel %vm387, %v1055, 0
        %v1063 = vsel %vm387, %v1056, 0
        %v1066 = vsel %vm387, %v1057, 0
        %v1069 = vsel %vm387, %v1058, 0
        %1071 = vmatpush.bf16.msra.mxu0 0
        %1072 = vmatpush.bf16.msra.mxu0 0
        %1073 = vmatpush.bf16.msra.mxu0 0
        %1074 = vmatpush.bf16.msra.mxu0 0
        %1075 = vmatpush.bf16.msra.mxu0 0
        %1076 = vmatpush.bf16.msra.mxu0 0
        %1077 = vmatpush.bf16.msra.mxu0 0
        %1078 = vmatpush.bf16.msra.mxu0 %v988
        %1079 = vmatmul.bf16.gmra.mxu0 %v1060
        %v1080 = vpop.f32.mrf.mxu0
        %v1081 = vadd.f32 %v1002, %v1080
        %v1082 = vpop.f32.mrf.mxu0
        %v1083 = vadd.f32 %v1007, %v1082
        %1084 = vmatmul.bf16.gmra.mxu0 %v1063
        %v1085 = vpop.f32.mrf.mxu0
        %v1086 = vadd.f32 %v1012, %v1085
        %v1087 = vpop.f32.mrf.mxu0
        %v1088 = vadd.f32 %v1017, %v1087
        %1089 = vmatmul.bf16.gmra.mxu0 %v1066
        %v1090 = vpop.f32.mrf.mxu0
        %v1091 = vadd.f32 %v1022, %v1090
        %v1092 = vpop.f32.mrf.mxu0
        %v1093 = vadd.f32 %v1027, %v1092
        %1094 = vmatmul.bf16.gmra.mxu0 %v1069
        %v1095 = vpop.f32.mrf.mxu0
        %v1096 = vadd.f32 %v1032, %v1095
        %v1097 = vpop.f32.mrf.mxu0
        %v1098 = vadd.f32 %v1037, %v1097
        %1099 = vdwg.mxu0
        %1100 = vmatpush.bf16.msra.mxu0 0
        %1101 = vmatpush.bf16.msra.mxu0 0
        %1102 = vmatpush.bf16.msra.mxu0 0
        %1103 = vmatpush.bf16.msra.mxu0 0
        %1104 = vmatpush.bf16.msra.mxu0 0
        %1105 = vmatpush.bf16.msra.mxu0 0
        %1106 = vmatpush.bf16.msra.mxu0 0
        %1107 = vmatpush.bf16.msra.mxu0 %v989
        %1108 = vmatmul.bf16.gmra.mxu0 %v1060
        %v1109 = vpop.f32.mrf.mxu0
        %v1110 = vadd.f32 %v1002, %v1109
        %v1111 = vpop.f32.mrf.mxu0
        %v1112 = vadd.f32 %v1007, %v1111
        %1113 = vmatmul.bf16.gmra.mxu0 %v1063
        %v1114 = vpop.f32.mrf.mxu0
        %v1115 = vadd.f32 %v1012, %v1114
        %v1116 = vpop.f32.mrf.mxu0
        %v1117 = vadd.f32 %v1017, %v1116
        %1118 = vmatmul.bf16.gmra.mxu0 %v1066
        %v1119 = vpop.f32.mrf.mxu0
        %v1120 = vadd.f32 %v1022, %v1119
        %v1121 = vpop.f32.mrf.mxu0
        %v1122 = vadd.f32 %v1027, %v1121
        %1123 = vmatmul.bf16.gmra.mxu0 %v1069
        %v1124 = vpop.f32.mrf.mxu0
        %v1125 = vadd.f32 %v1032, %v1124
        %v1126 = vpop.f32.mrf.mxu0
        %v1127 = vadd.f32 %v1037, %v1126
        %1128 = vdwg.mxu0
        %v1129 = vpack.c.bf16 %v1083, %v1081
        %v1130 = vpack.c.bf16 %v1112, %v1110
        %v1131 = vpack.c.bf16 %v1088, %v1086
        %v1132 = vpack.c.bf16 %v1117, %v1115
        %v1133 = vpack.c.bf16 %v1093, %v1091
        %v1134 = vpack.c.bf16 %v1122, %v1120
        %v1135 = vpack.c.bf16 %v1098, %v1096
        %v1136 = vpack.c.bf16 %v1127, %v1125
        %v1137 = vunpack.c.l.bf16 %v1129
        %v1138 = vunpack.c.l.bf16 %v1130
        %v1139 = vunpack.c.h.bf16 %v1129
        %v1140 = vunpack.c.h.bf16 %v1130
        %v1141 = vunpack.c.l.bf16 %v1131
        %v1142 = vunpack.c.l.bf16 %v1132
        %v1143 = vunpack.c.h.bf16 %v1131
        %v1144 = vunpack.c.h.bf16 %v1132
        %v1145 = vunpack.c.l.bf16 %v1133
        %v1146 = vunpack.c.l.bf16 %v1134
        %v1147 = vunpack.c.h.bf16 %v1133
        %v1148 = vunpack.c.h.bf16 %v1134
        %v1149 = vunpack.c.l.bf16 %v1135
        %v1150 = vunpack.c.l.bf16 %v1136
        %v1151 = vunpack.c.h.bf16 %v1135
        %v1152 = vunpack.c.h.bf16 %v1136
        %v1153 = vtanh.pop %v1137
        %v1154 = vtanh.pop %v1138
        %v1155 = vtanh.pop %v1139
        %v1156 = vtanh.pop %v1140
        %v1157 = vtanh.pop %v1141
        %v1158 = vtanh.pop %v1142
        %v1159 = vtanh.pop %v1143
        %v1160 = vtanh.pop %v1144
        %v1161 = vtanh.pop %v1145
        %v1162 = vtanh.pop %v1146
        %v1163 = vtanh.pop %v1147
        %v1164 = vtanh.pop %v1148
        %v1165 = vtanh.pop %v1149
        %v1166 = vtanh.pop %v1150
        %v1167 = vtanh.pop %v1151
        %v1168 = vtanh.pop %v1152
        %v1169 = vpack.c.bf16 %v1155, %v1153
        %v1170 = vpack.c.bf16 %v1156, %v1154
        %v1171 = vpack.c.bf16 %v1159, %v1157
        %v1172 = vpack.c.bf16 %v1160, %v1158
        %v1173 = vpack.c.bf16 %v1163, %v1161
        %v1174 = vpack.c.bf16 %v1164, %v1162
        %v1175 = vpack.c.bf16 %v1167, %v1165
        %v1176 = vpack.c.bf16 %v1168, %v1166
        %s1177 = scalar_lea.vmem %s3, 32
        %v1178 = vld [vmem:[%s1177] sm:$0xf]
        %v1179 = vld [vmem:[%s1177 + $0x4] sm:$0xf]
        %v1180 = vld [vmem:[%s1177 + $0x8] sm:$0xf]
        %v1181 = vld [vmem:[%s1177 + $0xc] sm:$0xf]
        %s1182 = scalar_lea.vmem %s4, 64
        %v1183 = vld [vmem:[%s1182] sm:$0xff]
        %v1184 = vld [vmem:[%s1182 + $0x8] sm:$0xff]
        %v1185 = vld [vmem:[%s1182 + $0x10] sm:$0xff]
        %v1186 = vld [vmem:[%s1182 + $0x18] sm:$0xff]
        %1188 = vset.pattern.permute.xlu0 0
        %1189 = vperm.xlu0 %1188, %v1183
        %v1190 = vpop.permute.xlu0 %1189
        %1193 = vset.pattern.permute.xlu0 0
        %1194 = vperm.xlu0 %1193, %v1184
        %v1195 = vpop.permute.xlu0 %1194
        %1198 = vset.pattern.permute.xlu0 0
        %1199 = vperm.xlu0 %1198, %v1185
        %v1200 = vpop.permute.xlu0 %1199
        %1203 = vset.pattern.permute.xlu0 0
        %1204 = vperm.xlu0 %1203, %v1186
        %v1205 = vpop.permute.xlu0 %1204
        %v1211 = vunpack.c.l.b16 %v1178
        %v1212 = vunpack.c.l.b16 %v1179
        %v1213 = vunpack.c.l.b16 %v1180
        %v1214 = vunpack.c.l.b16 %v1181
        %v1215 = vpack.c.b16 %v1212, %v1211
        %v1216 = vpack.c.b16 %v1214, %v1213
        %v1218 = vsel %vm544, %v1215, 0
        %v1221 = vsel %vm544, %v1216, 0
        %1223 = vmatpush.bf16.msra.mxu0 0
        %1224 = vmatpush.bf16.msra.mxu0 0
        %1225 = vmatpush.bf16.msra.mxu0 0
        %1226 = vmatpush.bf16.msra.mxu0 0
        %1227 = vmatpush.bf16.msra.mxu0 %v1175
        %1228 = vmatpush.bf16.msra.mxu0 %v1173
        %1229 = vmatpush.bf16.msra.mxu0 %v1171
        %1230 = vmatpush.bf16.msra.mxu0 %v1169
        %1231 = vmatmul.bf16.gmra.mxu0 %v1218
        %v1232 = vpop.f32.mrf.mxu0
        %v1233 = vadd.f32 %v1190, %v1232
        %v1234 = vpop.f32.mrf.mxu0
        %v1235 = vadd.f32 %v1195, %v1234
        %1236 = vmatmul.bf16.gmra.mxu0 %v1221
        %v1237 = vpop.f32.mrf.mxu0
        %v1238 = vadd.f32 %v1200, %v1237
        %v1239 = vpop.f32.mrf.mxu0
        %v1240 = vadd.f32 %v1205, %v1239
        %1241 = vdwg.mxu0
        %1242 = vmatpush.bf16.msra.mxu0 0
        %1243 = vmatpush.bf16.msra.mxu0 0
        %1244 = vmatpush.bf16.msra.mxu0 0
        %1245 = vmatpush.bf16.msra.mxu0 0
        %1246 = vmatpush.bf16.msra.mxu0 %v1176
        %1247 = vmatpush.bf16.msra.mxu0 %v1174
        %1248 = vmatpush.bf16.msra.mxu0 %v1172
        %1249 = vmatpush.bf16.msra.mxu0 %v1170
        %1250 = vmatmul.bf16.gmra.mxu0 %v1218
        %v1251 = vpop.f32.mrf.mxu0
        %v1252 = vadd.f32 %v1190, %v1251
        %v1253 = vpop.f32.mrf.mxu0
        %v1254 = vadd.f32 %v1195, %v1253
        %1255 = vmatmul.bf16.gmra.mxu0 %v1221
        %v1256 = vpop.f32.mrf.mxu0
        %v1257 = vadd.f32 %v1200, %v1256
        %v1258 = vpop.f32.mrf.mxu0
        %v1259 = vadd.f32 %v1205, %v1258
        %1260 = vdwg.mxu0
        %v1261 = vpack.c.bf16 %v1252, %v1233
        %v1262 = vpack.c.bf16 %v1254, %v1235
        %v1263 = vunpack.c.l.bf16 %v1261
        %v1264 = vunpack.c.h.bf16 %v1261
        %v1265 = vunpack.c.l.bf16 %v1262
        %v1266 = vunpack.c.h.bf16 %v1262
        %v1267 = vtanh.pop %v1263
        %v1268 = vtanh.pop %v1264
        %v1269 = vtanh.pop %v1265
        %v1270 = vtanh.pop %v1266
        %v1271 = vpack.c.bf16 %v1268, %v1267
        %v1272 = vpack.c.bf16 %v1270, %v1269
        %v1273 = vunpack.c.l.bf16 %v1271
        %v1274 = vunpack.c.h.bf16 %v1271
        %v1275 = vunpack.c.l.bf16 %v1272
        %v1276 = vunpack.c.h.bf16 %v1272
        %v1277 = vmul.f32 %v1273, 1.442695
        %v1278 = vpow.pop %v1277
        %v1279 = vmul.f32 %v1274, 1.442695
        %v1280 = vpow.pop %v1279
        %v1281 = vmul.f32 %v1275, 1.442695
        %v1282 = vpow.pop %v1281
        %v1283 = vmul.f32 %v1276, 1.442695
        %v1284 = vpow.pop %v1283
        %v1285 = vpack.c.bf16 %v1280, %v1278
        %v1286 = vpack.c.bf16 %v1284, %v1282
        %v1287 = vunpack.c.l.bf16 %v1285
        %v1288 = vunpack.c.h.bf16 %v1285
        %v1289 = vunpack.c.l.bf16 %v1286
        %v1290 = vunpack.c.h.bf16 %v1286
        %v1291 = vmul.f32 %v623, %v1287
        %v1292 = vmul.f32 %v624, %v1288
        %v1293 = vmul.f32 %v625, %v1289
        %v1294 = vmul.f32 %v626, %v1290
        %v1295 = vadd.f32 %v1291, %v1238
        %v1296 = vadd.f32 %v1292, %v1257
        %v1297 = vadd.f32 %v1293, %v1240
        %v1298 = vadd.f32 %v1294, %v1259
        %v1299 = vadd.f32 %v1273, %v1275
        %v1300 = vrot.slane %v1299, 4
        %v1301 = vadd.f32 %v1299, %v1300
        %v1302 = vrot.slane %v1301, 2
        %v1303 = vadd.f32 %v1301, %v1302
        %v1304 = vrot.slane %v1303, 1
        %v1305 = vadd.f32 %v1303, %v1304
        %v1306 = vadd.f32 %v1274, %v1276
        %v1307 = vrot.slane %v1306, 4
        %v1308 = vadd.f32 %v1306, %v1307
        %v1309 = vrot.slane %v1308, 2
        %v1310 = vadd.f32 %v1308, %v1309
        %v1311 = vrot.slane %v1310, 1
        %v1312 = vadd.f32 %v1310, %v1311
        %v1313 = vadd.f32 %v977, %v1305
        %v1314 = vadd.f32 %v978, %v1312
        %s1315 = scalar_lea.vmem %s1, 96
        %v1316 = vld [vmem:[%s1315] sm:$0xf]
        %v1317 = vld [vmem:[%s1315 + $0x4] sm:$0xf]
        %v1318 = vld [vmem:[%s1315 + $0x8] sm:$0xf]
        %v1319 = vld [vmem:[%s1315 + $0xc] sm:$0xf]
        %v1320 = vld [vmem:[%s1315 + $0x10] sm:$0xf]
        %v1321 = vld [vmem:[%s1315 + $0x14] sm:$0xf]
        %v1322 = vld [vmem:[%s1315 + $0x18] sm:$0xf]
        %v1323 = vld [vmem:[%s1315 + $0x1c] sm:$0xf]
        %v1324 = vpack.c.bf16 %v1297, %v1295
        %v1325 = vpack.c.bf16 %v1298, %v1296
        %s1326 = scalar_lea.vmem %s2, 192
        %v1327 = vld [vmem:[%s1326] sm:$0xff]
        %v1328 = vld [vmem:[%s1326 + $0x8] sm:$0xff]
        %v1329 = vld [vmem:[%s1326 + $0x10] sm:$0xff]
        %v1330 = vld [vmem:[%s1326 + $0x18] sm:$0xff]
        %v1331 = vld [vmem:[%s1326 + $0x20] sm:$0xff]
        %v1332 = vld [vmem:[%s1326 + $0x28] sm:$0xff]
        %v1333 = vld [vmem:[%s1326 + $0x30] sm:$0xff]
        %v1334 = vld [vmem:[%s1326 + $0x38] sm:$0xff]
        %1336 = vset.pattern.permute.xlu0 0
        %1337 = vperm.xlu0 %1336, %v1327
        %v1338 = vpop.permute.xlu0 %1337
        %1341 = vset.pattern.permute.xlu0 0
        %1342 = vperm.xlu0 %1341, %v1328
        %v1343 = vpop.permute.xlu0 %1342
        %1346 = vset.pattern.permute.xlu0 0
        %1347 = vperm.xlu0 %1346, %v1329
        %v1348 = vpop.permute.xlu0 %1347
        %1351 = vset.pattern.permute.xlu0 0
        %1352 = vperm.xlu0 %1351, %v1330
        %v1353 = vpop.permute.xlu0 %1352
        %1356 = vset.pattern.permute.xlu0 0
        %1357 = vperm.xlu0 %1356, %v1331
        %v1358 = vpop.permute.xlu0 %1357
        %1361 = vset.pattern.permute.xlu0 0
        %1362 = vperm.xlu0 %1361, %v1332
        %v1363 = vpop.permute.xlu0 %1362
        %1366 = vset.pattern.permute.xlu0 0
        %1367 = vperm.xlu0 %1366, %v1333
        %v1368 = vpop.permute.xlu0 %1367
        %1371 = vset.pattern.permute.xlu0 0
        %1372 = vperm.xlu0 %1371, %v1334
        %v1373 = vpop.permute.xlu0 %1372
        %v1383 = vunpack.c.l.b16 %v1316
        %v1384 = vunpack.c.l.b16 %v1317
        %v1385 = vunpack.c.l.b16 %v1318
        %v1386 = vunpack.c.l.b16 %v1319
        %v1387 = vunpack.c.l.b16 %v1320
        %v1388 = vunpack.c.l.b16 %v1321
        %v1389 = vunpack.c.l.b16 %v1322
        %v1390 = vunpack.c.l.b16 %v1323
        %v1391 = vpack.c.b16 %v1384, %v1383
        %v1392 = vpack.c.b16 %v1386, %v1385
        %v1393 = vpack.c.b16 %v1388, %v1387
        %v1394 = vpack.c.b16 %v1390, %v1389
        %v1396 = vsel %vm387, %v1391, 0
        %v1399 = vsel %vm387, %v1392, 0
        %v1402 = vsel %vm387, %v1393, 0
        %v1405 = vsel %vm387, %v1394, 0
        %1407 = vmatpush.bf16.msra.mxu0 0
        %1408 = vmatpush.bf16.msra.mxu0 0
        %1409 = vmatpush.bf16.msra.mxu0 0
        %1410 = vmatpush.bf16.msra.mxu0 0
        %1411 = vmatpush.bf16.msra.mxu0 0
        %1412 = vmatpush.bf16.msra.mxu0 0
        %1413 = vmatpush.bf16.msra.mxu0 0
        %1414 = vmatpush.bf16.msra.mxu0 %v1324
        %1415 = vmatmul.bf16.gmra.mxu0 %v1396
        %v1416 = vpop.f32.mrf.mxu0
        %v1417 = vadd.f32 %v1338, %v1416
        %v1418 = vpop.f32.mrf.mxu0
        %v1419 = vadd.f32 %v1343, %v1418
        %1420 = vmatmul.bf16.gmra.mxu0 %v1399
        %v1421 = vpop.f32.mrf.mxu0
        %v1422 = vadd.f32 %v1348, %v1421
        %v1423 = vpop.f32.mrf.mxu0
        %v1424 = vadd.f32 %v1353, %v1423
        %1425 = vmatmul.bf16.gmra.mxu0 %v1402
        %v1426 = vpop.f32.mrf.mxu0
        %v1427 = vadd.f32 %v1358, %v1426
        %v1428 = vpop.f32.mrf.mxu0
        %v1429 = vadd.f32 %v1363, %v1428
        %1430 = vmatmul.bf16.gmra.mxu0 %v1405
        %v1431 = vpop.f32.mrf.mxu0
        %v1432 = vadd.f32 %v1368, %v1431
        %v1433 = vpop.f32.mrf.mxu0
        %v1434 = vadd.f32 %v1373, %v1433
        %1435 = vdwg.mxu0
        %1436 = vmatpush.bf16.msra.mxu0 0
        %1437 = vmatpush.bf16.msra.mxu0 0
        %1438 = vmatpush.bf16.msra.mxu0 0
        %1439 = vmatpush.bf16.msra.mxu0 0
        %1440 = vmatpush.bf16.msra.mxu0 0
        %1441 = vmatpush.bf16.msra.mxu0 0
        %1442 = vmatpush.bf16.msra.mxu0 0
        %1443 = vmatpush.bf16.msra.mxu0 %v1325
        %1444 = vmatmul.bf16.gmra.mxu0 %v1396
        %v1445 = vpop.f32.mrf.mxu0
        %v1446 = vadd.f32 %v1338, %v1445
        %v1447 = vpop.f32.mrf.mxu0
        %v1448 = vadd.f32 %v1343, %v1447
        %1449 = vmatmul.bf16.gmra.mxu0 %v1399
        %v1450 = vpop.f32.mrf.mxu0
        %v1451 = vadd.f32 %v1348, %v1450
        %v1452 = vpop.f32.mrf.mxu0
        %v1453 = vadd.f32 %v1353, %v1452
        %1454 = vmatmul.bf16.gmra.mxu0 %v1402
        %v1455 = vpop.f32.mrf.mxu0
        %v1456 = vadd.f32 %v1358, %v1455
        %v1457 = vpop.f32.mrf.mxu0
        %v1458 = vadd.f32 %v1363, %v1457
        %1459 = vmatmul.bf16.gmra.mxu0 %v1405
        %v1460 = vpop.f32.mrf.mxu0
        %v1461 = vadd.f32 %v1368, %v1460
        %v1462 = vpop.f32.mrf.mxu0
        %v1463 = vadd.f32 %v1373, %v1462
        %1464 = vdwg.mxu0
        %v1465 = vpack.c.bf16 %v1419, %v1417
        %v1466 = vpack.c.bf16 %v1448, %v1446
        %v1467 = vpack.c.bf16 %v1424, %v1422
        %v1468 = vpack.c.bf16 %v1453, %v1451
        %v1469 = vpack.c.bf16 %v1429, %v1427
        %v1470 = vpack.c.bf16 %v1458, %v1456
        %v1471 = vpack.c.bf16 %v1434, %v1432
        %v1472 = vpack.c.bf16 %v1463, %v1461
        %v1473 = vunpack.c.l.bf16 %v1465
        %v1474 = vunpack.c.l.bf16 %v1466
        %v1475 = vunpack.c.h.bf16 %v1465
        %v1476 = vunpack.c.h.bf16 %v1466
        %v1477 = vunpack.c.l.bf16 %v1467
        %v1478 = vunpack.c.l.bf16 %v1468
        %v1479 = vunpack.c.h.bf16 %v1467
        %v1480 = vunpack.c.h.bf16 %v1468
        %v1481 = vunpack.c.l.bf16 %v1469
        %v1482 = vunpack.c.l.bf16 %v1470
        %v1483 = vunpack.c.h.bf16 %v1469
        %v1484 = vunpack.c.h.bf16 %v1470
        %v1485 = vunpack.c.l.bf16 %v1471
        %v1486 = vunpack.c.l.bf16 %v1472
        %v1487 = vunpack.c.h.bf16 %v1471
        %v1488 = vunpack.c.h.bf16 %v1472
        %v1489 = vtanh.pop %v1473
        %v1490 = vtanh.pop %v1474
        %v1491 = vtanh.pop %v1475
        %v1492 = vtanh.pop %v1476
        %v1493 = vtanh.pop %v1477
        %v1494 = vtanh.pop %v1478
        %v1495 = vtanh.pop %v1479
        %v1496 = vtanh.pop %v1480
        %v1497 = vtanh.pop %v1481
        %v1498 = vtanh.pop %v1482
        %v1499 = vtanh.pop %v1483
        %v1500 = vtanh.pop %v1484
        %v1501 = vtanh.pop %v1485
        %v1502 = vtanh.pop %v1486
        %v1503 = vtanh.pop %v1487
        %v1504 = vtanh.pop %v1488
        %v1505 = vpack.c.bf16 %v1491, %v1489
        %v1506 = vpack.c.bf16 %v1492, %v1490
        %v1507 = vpack.c.bf16 %v1495, %v1493
        %v1508 = vpack.c.bf16 %v1496, %v1494
        %v1509 = vpack.c.bf16 %v1499, %v1497
        %v1510 = vpack.c.bf16 %v1500, %v1498
        %v1511 = vpack.c.bf16 %v1503, %v1501
        %v1512 = vpack.c.bf16 %v1504, %v1502
        %s1513 = scalar_lea.vmem %s3, 48
        %v1514 = vld [vmem:[%s1513] sm:$0xf]
        %v1515 = vld [vmem:[%s1513 + $0x4] sm:$0xf]
        %v1516 = vld [vmem:[%s1513 + $0x8] sm:$0xf]
        %v1517 = vld [vmem:[%s1513 + $0xc] sm:$0xf]
        %s1518 = scalar_lea.vmem %s4, 96
        %v1519 = vld [vmem:[%s1518] sm:$0xff]
        %v1520 = vld [vmem:[%s1518 + $0x8] sm:$0xff]
        %v1521 = vld [vmem:[%s1518 + $0x10] sm:$0xff]
        %v1522 = vld [vmem:[%s1518 + $0x18] sm:$0xff]
        %1524 = vset.pattern.permute.xlu0 0
        %1525 = vperm.xlu0 %1524, %v1519
        %v1526 = vpop.permute.xlu0 %1525
        %1529 = vset.pattern.permute.xlu0 0
        %1530 = vperm.xlu0 %1529, %v1520
        %v1531 = vpop.permute.xlu0 %1530
        %1534 = vset.pattern.permute.xlu0 0
        %1535 = vperm.xlu0 %1534, %v1521
        %v1536 = vpop.permute.xlu0 %1535
        %1539 = vset.pattern.permute.xlu0 0
        %1540 = vperm.xlu0 %1539, %v1522
        %v1541 = vpop.permute.xlu0 %1540
        %v1547 = vunpack.c.l.b16 %v1514
        %v1548 = vunpack.c.l.b16 %v1515
        %v1549 = vunpack.c.l.b16 %v1516
        %v1550 = vunpack.c.l.b16 %v1517
        %v1551 = vpack.c.b16 %v1548, %v1547
        %v1552 = vpack.c.b16 %v1550, %v1549
        %v1554 = vsel %vm544, %v1551, 0
        %v1557 = vsel %vm544, %v1552, 0
        %1559 = vmatpush.bf16.msra.mxu0 0
        %1560 = vmatpush.bf16.msra.mxu0 0
        %1561 = vmatpush.bf16.msra.mxu0 0
        %1562 = vmatpush.bf16.msra.mxu0 0
        %1563 = vmatpush.bf16.msra.mxu0 %v1511
        %1564 = vmatpush.bf16.msra.mxu0 %v1509
        %1565 = vmatpush.bf16.msra.mxu0 %v1507
        %1566 = vmatpush.bf16.msra.mxu0 %v1505
        %1567 = vmatmul.bf16.gmra.mxu0 %v1554
        %v1568 = vpop.f32.mrf.mxu0
        %v1569 = vadd.f32 %v1526, %v1568
        %v1570 = vpop.f32.mrf.mxu0
        %v1571 = vadd.f32 %v1531, %v1570
        %1572 = vmatmul.bf16.gmra.mxu0 %v1557
        %v1573 = vpop.f32.mrf.mxu0
        %v1574 = vadd.f32 %v1536, %v1573
        %v1575 = vpop.f32.mrf.mxu0
        %v1576 = vadd.f32 %v1541, %v1575
        %1577 = vdwg.mxu0
        %1578 = vmatpush.bf16.msra.mxu0 0
        %1579 = vmatpush.bf16.msra.mxu0 0
        %1580 = vmatpush.bf16.msra.mxu0 0
        %1581 = vmatpush.bf16.msra.mxu0 0
        %1582 = vmatpush.bf16.msra.mxu0 %v1512
        %1583 = vmatpush.bf16.msra.mxu0 %v1510
        %1584 = vmatpush.bf16.msra.mxu0 %v1508
        %1585 = vmatpush.bf16.msra.mxu0 %v1506
        %1586 = vmatmul.bf16.gmra.mxu0 %v1554
        %v1587 = vpop.f32.mrf.mxu0
        %v1588 = vadd.f32 %v1526, %v1587
        %v1589 = vpop.f32.mrf.mxu0
        %v1590 = vadd.f32 %v1531, %v1589
        %1591 = vmatmul.bf16.gmra.mxu0 %v1557
        %v1592 = vpop.f32.mrf.mxu0
        %v1593 = vadd.f32 %v1536, %v1592
        %v1594 = vpop.f32.mrf.mxu0
        %v1595 = vadd.f32 %v1541, %v1594
        %1596 = vdwg.mxu0
        %v1597 = vpack.c.bf16 %v1588, %v1569
        %v1598 = vpack.c.bf16 %v1590, %v1571
        %v1599 = vunpack.c.l.bf16 %v1597
        %v1600 = vunpack.c.h.bf16 %v1597
        %v1601 = vunpack.c.l.bf16 %v1598
        %v1602 = vunpack.c.h.bf16 %v1598
        %v1603 = vtanh.pop %v1599
        %v1604 = vtanh.pop %v1600
        %v1605 = vtanh.pop %v1601
        %v1606 = vtanh.pop %v1602
        %v1607 = vpack.c.bf16 %v1604, %v1603
        %v1608 = vpack.c.bf16 %v1606, %v1605
        %v1609 = vunpack.c.l.bf16 %v1607
        %v1610 = vunpack.c.h.bf16 %v1607
        %v1611 = vunpack.c.l.bf16 %v1608
        %v1612 = vunpack.c.h.bf16 %v1608
        %v1613 = vmul.f32 %v1609, 1.442695
        %v1614 = vpow.pop %v1613
        %v1615 = vmul.f32 %v1610, 1.442695
        %v1616 = vpow.pop %v1615
        %v1617 = vmul.f32 %v1611, 1.442695
        %v1618 = vpow.pop %v1617
        %v1619 = vmul.f32 %v1612, 1.442695
        %v1620 = vpow.pop %v1619
        %v1621 = vpack.c.bf16 %v1616, %v1614
        %v1622 = vpack.c.bf16 %v1620, %v1618
        %v1623 = vunpack.c.l.bf16 %v1621
        %v1624 = vunpack.c.h.bf16 %v1621
        %v1625 = vunpack.c.l.bf16 %v1622
        %v1626 = vunpack.c.h.bf16 %v1622
        %v1627 = vmul.f32 %v959, %v1623
        %v1628 = vmul.f32 %v960, %v1624
        %v1629 = vmul.f32 %v961, %v1625
        %v1630 = vmul.f32 %v962, %v1626
        %v1631 = vadd.f32 %v1627, %v1574
        %v1632 = vadd.f32 %v1628, %v1593
        %v1633 = vadd.f32 %v1629, %v1576
        %v1634 = vadd.f32 %v1630, %v1595
        %v1635 = vadd.f32 %v1609, %v1611
        %v1636 = vrot.slane %v1635, 4
        %v1637 = vadd.f32 %v1635, %v1636
        %v1638 = vrot.slane %v1637, 2
        %v1639 = vadd.f32 %v1637, %v1638
        %v1640 = vrot.slane %v1639, 1
        %v1641 = vadd.f32 %v1639, %v1640
        %v1642 = vadd.f32 %v1610, %v1612
        %v1643 = vrot.slane %v1642, 4
        %v1644 = vadd.f32 %v1642, %v1643
        %v1645 = vrot.slane %v1644, 2
        %v1646 = vadd.f32 %v1644, %v1645
        %v1647 = vrot.slane %v1646, 1
        %v1648 = vadd.f32 %v1646, %v1647
        %v1649 = vadd.f32 %v1313, %v1641
        %v1650 = vadd.f32 %v1314, %v1648
        %1651 = vst [vmem:[%s284] sm:$0xff] %v1631
        %1652 = vst [vmem:[%s284 + $0x8] sm:$0xff] %v1632
        %1653 = vst [vmem:[%s284 + $0x10] sm:$0xff] %v1633
        %1654 = vst [vmem:[%s284 + $0x18] sm:$0xff] %v1634
        %1655 = vst [vmem:[%s284 + $0x20] sm:$0xff] %v1295
        %1656 = vst [vmem:[%s284 + $0x28] sm:$0xff] %v1296
        %1657 = vst [vmem:[%s284 + $0x30] sm:$0xff] %v1297
        %1658 = vst [vmem:[%s284 + $0x38] sm:$0xff] %v1298
        %v1659 = vmul.f32 %v1631, %v1631
        %v1660 = vmul.f32 %v1632, %v1632
        %v1661 = vmul.f32 %v1633, %v1633
        %v1662 = vmul.f32 %v1634, %v1634
        %v1663 = vadd.f32 %v1659, %v1661
        %v1664 = vrot.slane %v1663, 4
        %v1665 = vadd.f32 %v1663, %v1664
        %v1666 = vrot.slane %v1665, 2
        %v1667 = vadd.f32 %v1665, %v1666
        %v1668 = vrot.slane %v1667, 1
        %v1669 = vadd.f32 %v1667, %v1668
        %v1670 = vadd.f32 %v1660, %v1662
        %v1671 = vrot.slane %v1670, 4
        %v1672 = vadd.f32 %v1670, %v1671
        %v1673 = vrot.slane %v1672, 2
        %v1674 = vadd.f32 %v1672, %v1673
        %v1675 = vrot.slane %v1674, 1
        %v1676 = vadd.f32 %v1674, %v1675
        %v1677 = vmul.f32 %v1295, %v1295
        %v1678 = vmul.f32 %v1296, %v1296
        %v1679 = vmul.f32 %v1297, %v1297
        %v1680 = vmul.f32 %v1298, %v1298
        %v1681 = vadd.f32 %v1677, %v1679
        %v1682 = vrot.slane %v1681, 4
        %v1683 = vadd.f32 %v1681, %v1682
        %v1684 = vrot.slane %v1683, 2
        %v1685 = vadd.f32 %v1683, %v1684
        %v1686 = vrot.slane %v1685, 1
        %v1687 = vadd.f32 %v1685, %v1686
        %v1688 = vadd.f32 %v1678, %v1680
        %v1689 = vrot.slane %v1688, 4
        %v1690 = vadd.f32 %v1688, %v1689
        %v1691 = vrot.slane %v1690, 2
        %v1692 = vadd.f32 %v1690, %v1691
        %v1693 = vrot.slane %v1692, 1
        %v1694 = vadd.f32 %v1692, %v1693
        %v1695 = vadd.f32 %v1669, %v1687
        %v1696 = vadd.f32 %v1676, %v1694
        %v1697 = vmul.f32 %v1695, -0.5
        %v1698 = vmul.f32 %v1696, -0.5
        %v1699 = vsub.f32 %v1697, 29.406033
        %v1700 = vsub.f32 %v1698, 29.406033
        %vm1701 = vcmask 1040384
        %v1702 = vsel %vm1701, %v1699, %v1649
        %v1703 = vsel %vm1701, %v1700, %v1650
        %v1706 = vrot.slane %v1703, 6
        %vm1707 = vcmask 1041408
        %v1708 = vsel %vm1707, %v1702, %v1706
        %1710 = vst [vmem:[%s298] sm:$0xf] %v1708
        %s1711 = sand.u32 %s139, 1
        %s1712 = scalar_lea.sflag [#allocation4], %s1711
        %s1713 = sand.u32 %s139, 1
        %s1714 = smul.addr %s1713, 64
        %s1715 = scalar_lea.vmem [#allocation3], %s1714
        %s1716 = smul.u32 2, %s21
        %p1717 = scmp.lt.s32.totalorder %s1716, 3
        %s1718 = scalar_select %p1717, %s1716, 3
        %s1719 = smul.addr %s1718, 2
        %s1720 = scalar_lea.vmem %s6, %s1719
        // Predicated region
        $region64: #{nf_forward.1} parent=58 // pred_check
          %p1721 = pneg %p149
        $region65: #{nf_forward.1} parent=58 // pred_check_branch
          %1723 = sbr.rel (%p1721) target = $region67
        $region66: #{nf_forward.1} parent=58 // pred_region
          %s1724 = smul.u32 2, %s21
          %1726 = vsyncadd %s1712, 0
          %s1727 = smul.addr %s1724, 8
          %s1728 = scalar_lea.hbm %s5, %s1727
          %s1729 = sshll.u32 %s1715, 4
          %s1730 = int_to_ptr.vmem [resolvable:$true] %s1729
          %s1731 = sshll.u32 %s1728, 4
          %s1732 = int_to_ptr.hbm [resolvable:$true] %s1731
          %1737 = dma.vmem_to_hbm [thread:$0]  %s1730, 1024, %s1732, %s1712, 256, 512, 16
        $region67: #{nf_forward.1} parent=58 // pred_fallthru
          _
        // Predicated region
        $region68: #{nf_forward.1} parent=58 // pred_check
          %p1738 = pneg %p175
        $region69: #{nf_forward.1} parent=58 // pred_check_branch
          %1740 = sbr.rel (%p1738) target = $region71
        $region70: #{nf_forward.1} parent=58 // pred_region
          %s1741 = smul.u32 2, %s21
        $region71: #{nf_forward.1} parent=58 // pred_fallthru
          _
      $region59: #{nf_forward.1} parent=5 // pred_fallthru
        _
      %p1742 = scmp.le.s32.totalorder 2, %s16
      // Predicated region
      $region72: #{nf_forward.1} parent=5 // pred_check
        %p1743 = pneg %p1742
      $region73: #{nf_forward.1} parent=5 // pred_check_branch
        %1745 = sbr.rel (%p1743) target = $region75
      $region74: #{nf_forward.1} parent=5 // pred_region
        %s1746 = ssub.s32 %s16, 2
        // Predicated region
        $region76: #{nf_forward.1} parent=74 // pred_check
          %p1747 = pneg %p155
        $region77: #{nf_forward.1} parent=74 // pred_check_branch
          %1749 = sbr.rel (%p1747) target = $region79
        $region78: #{nf_forward.1} parent=74 // pred_region
          %s1750 = sand.u32 %s140, 1
          %s1751 = scalar_lea.sflag [#allocation4], %s1750
          %s1752 = sand.u32 %s140, 1
          %s1753 = smul.addr %s1752, 64
          %s1754 = scalar_lea.vmem [#allocation3], %s1753
          %1756 = dma.done %s1751, 1024
        $region79: #{nf_forward.1} parent=74 // pred_fallthru
          _
        // Predicated region
        $region80: #{nf_forward.1} parent=74 // pred_check
          %p1757 = pneg %p181
        $region81: #{nf_forward.1} parent=74 // pred_check_branch
          %1759 = sbr.rel (%p1757) target = $region83
        $region82: #{nf_forward.1} parent=74 // pred_region
          %s1760 = smul.u32 2, %s22
          %p1761 = scmp.lt.s32.totalorder %s1760, 3
          %s1762 = scalar_select %p1761, %s1760, 3
          %s1763 = smul.addr %s1762, 2
          %s1764 = scalar_lea.vmem %s6, %s1763
        $region83: #{nf_forward.1} parent=74 // pred_fallthru
          _
      $region75: #{nf_forward.1} parent=5 // pred_fallthru
        _
    $region6: #{nf_forward.1} parent=1 // loop_footer
      %s20 = sadd.s32 1, %s16
    $region7: #{nf_forward.1} parent=1 // loop_footer_branch
      %15 = sbr.rel target = $region3
    $region8: #{nf_forward.1} parent=1 // loop_exit
      _
    %1765 = vsyncpa [#allocation4], 1
    %s1766 = scalar_lea.sflag [#allocation4], 1
    %1767 = vsyncpa %s1766, 1

</llo_original>
